<compile_context>
chip_gen: v5e
topology: v5e:2x2
jax: 0.10.0
libtpu: 0.0.40
codegen_flags: <defaults>
</compile_context>

<pallas_src>
import functools
import math

import jax
import jax.numpy as jnp
import numpy as np
from jax.experimental import pallas as pl
from jax.experimental.pallas import tpu as pltpu


# ---------------------------------------------------------------------------
# Fused Pallas kernel
# ---------------------------------------------------------------------------
def _mha_fused_kernel(
    q_in_ref, k_in_ref, v_in_ref,          # (1, S, D) activations (fp32)
    wqkv_ref, bqkv_ref, wo_ref, bo_ref,    # (D,3D) mxu / (1,3D) f32 / (D,D) mxu / (1,D) f32
    mask_ref,                              # (1, 1, S) fp32, 0.0 == masked
    o_ref,                                 # (1, tq, D) output tile
    q_scr, k_scr, v_scr, attn_scr,         # VMEM scratch
    *, num_heads, shared_qkv, mxu_dtype,
):
    S = k_in_ref.shape[1]
    D = k_in_ref.shape[2]
    tq = o_ref.shape[1]
    d_k = D // num_heads
    inv_sqrt_dk = 1.0 / math.sqrt(d_k)
    qi = pl.program_id(1)

    # --- projections: once per batch element (qi == 0), all S rows ----------
    @pl.when(qi == 0)
    def _project():
        b_all = bqkv_ref[...]                                  # (1, 3D) fp32
        if shared_qkv:
            # Self-attention fast path: one fused (S,D)x(D,3D) MXU matmul.
            x = q_in_ref[0].astype(mxu_dtype)
            qkv = jnp.dot(x, wqkv_ref[...],
                          preferred_element_type=jnp.float32) + b_all
            q = qkv[:, 0:D]
            k = qkv[:, D:2 * D]
            v = qkv[:, 2 * D:3 * D]
        else:
            # General (cross-attention) path: distinct activations force
            # three matmuls, but weights are already (in,out) + mxu_dtype.
            q = jnp.dot(q_in_ref[0].astype(mxu_dtype), wqkv_ref[:, 0:D],
                        preferred_element_type=jnp.float32) + b_all[:, 0:D]
            k = jnp.dot(k_in_ref[0].astype(mxu_dtype), wqkv_ref[:, D:2 * D],
                        preferred_element_type=jnp.float32) + b_all[:, D:2 * D]
            v = jnp.dot(v_in_ref[0].astype(mxu_dtype), wqkv_ref[:, 2 * D:3 * D],
                        preferred_element_type=jnp.float32) + b_all[:, 2 * D:3 * D]
        q_scr[...] = (q * inv_sqrt_dk).astype(q_scr.dtype)     # scale folded into Q
        k_scr[...] = k.astype(k_scr.dtype)
        v_scr[...] = v.astype(v_scr.dtype)

    # --- per-q-tile attention -------------------------------------------------
    row0 = pl.multiple_of(qi * tq, tq)
    q_tile = q_scr[pl.ds(row0, tq), :]        # (tq, D), mxu_dtype, pre-scaled
    k_all = k_scr[...]                        # (S, D), mxu_dtype
    v_all = v_scr[...]                        # (S, D), mxu_dtype

    # Hoisted once (H-way unrolled loop below would otherwise emit H broadcasts).
    masked = jnp.broadcast_to(mask_ref[0], (tq, S)) == 0.0     # (tq, S) bool

    # (m, k) x (n, k) -> (m, n): contraction on the last dim of both operands
    # (handled natively by the MXU, no transpose materialized).
    trans_b = (((1,), (1,)), ((), ()))
    approx_recip = mxu_dtype != jnp.float32

    for h in range(num_heads):
        sl = slice(h * d_k, (h + 1) * d_k)
        s = jax.lax.dot_general(q_tile[:, sl], k_all[:, sl], trans_b,
                                preferred_element_type=jnp.float32)   # (tq, S)
        s = jnp.where(masked, jnp.float32(-1e9), s)   # exact masked_fill semantics
        m = jnp.max(s, axis=-1, keepdims=True)        # fp32 softmax math
        e = jnp.exp(s - m)
        l = jnp.sum(e, axis=-1, keepdims=True)        # (tq, 1)
        acc = jnp.dot(e.astype(mxu_dtype), v_all[:, sl],
                      preferred_element_type=jnp.float32)             # (tq, d_k)
        # normalization deferred to the small (tq, d_k) tile (flash style);
        # heads land in contiguous d_k slices == torch transpose(1,2).view(...)
        attn_scr[:, sl] = (acc * pl.reciprocal(l, approx=approx_recip)
                           ).astype(attn_scr.dtype)

    # --- output projection ------------------------------------------------------
    o = jnp.dot(attn_scr[...], wo_ref[...],
                preferred_element_type=jnp.float32) + bo_ref[...]
    o_ref[0] = o.astype(o_ref.dtype)


# ---------------------------------------------------------------------------
# Wrapper
# ---------------------------------------------------------------------------
def multi_headed_attention(params, query, key, value, mask, num_heads,
                           mxu_dtype=jnp.bfloat16, q_block=256):
    """Fused forward of MultiHeadedAttention (dropout = identity).

    query/key/value: (B, S, D) float32.  mask: (B, S), 0 = masked out.
    params: PyTorch-layout weights w*: (D, D) == (out, in), biases b*: (D,).
    Returns (B, S, D) float32 -- what the PyTorch module's forward() returns.
    """
    B, S, D = query.shape
    assert D % num_heads == 0
    tq = min(q_block, S)
    assert S % tq == 0 and tq % 8 == 0
    num_q_tiles = S // tq

    # Self-attention detection -> fused single QKV projection matmul.
    shared_qkv = (query is key) and (key is value)

    # One-time wrapper-side weight prep: transpose to (in, out), fuse Q/K/V,
    # cast to the MXU dtype (so the kernel never casts or transposes weights).
    wqkv = jnp.concatenate(
        [params["wq"].T, params["wk"].T, params["wv"].T], axis=1
    ).astype(mxu_dtype)                                            # (D, 3D)
    bqkv = jnp.concatenate(
        [params["bq"], params["bk"], params["bv"]]
    ).reshape(1, 3 * D).astype(jnp.float32)                        # (1, 3D)
    wo = params["wo"].T.astype(mxu_dtype)                          # (D, D)
    bo = params["bo"].reshape(1, D).astype(jnp.float32)            # (1, D)

    maskf = (mask != 0).astype(jnp.float32).reshape(B, 1, S)       # 1.0 keep / 0.0 masked

    # Explicit VMEM budget: resident weights + double-buffered activation
    # blocks + scratch, with headroom; capped at v7x's 64 MiB per TensorCore.
    itm = jnp.dtype(mxu_dtype).itemsize
    est = ((4 * D * D) * itm                  # wqkv + wo resident
           + 3 * S * D * 4 * 2                # q/k/v input blocks (fp32, 2-buf)
           + (3 * S * D + tq * D) * itm       # projection + staging scratch
           + tq * D * 4 * 2                   # output block (fp32, 2-buf)
           + (4 * D + S) * 4 * 4)             # biases + mask + slack
    vmem_limit = int(min(64 << 20, max(32 << 20, 2 * est)))

    kernel = functools.partial(
        _mha_fused_kernel, num_heads=num_heads, shared_qkv=shared_qkv,
        mxu_dtype=mxu_dtype)

    full_spec = pl.BlockSpec((1, S, D), lambda b, qi: (b, 0, 0))   # resident per batch
    const2d = lambda shape: pl.BlockSpec(shape, lambda b, qi: (0, 0))

    return pl.pallas_call(
        kernel,
        out_shape=jax.ShapeDtypeStruct((B, S, D), jnp.float32),
        grid=(B, num_q_tiles),
        in_specs=[
            full_spec, full_spec, full_spec,      # query, key, value
            const2d((D, 3 * D)),                  # wqkv (resident)
            const2d((1, 3 * D)),                  # bqkv
            const2d((D, D)),                      # wo (resident)
            const2d((1, D)),                      # bo
            pl.BlockSpec((1, 1, S), lambda b, qi: (b, 0, 0)),   # mask
        ],
        out_specs=pl.BlockSpec((1, tq, D), lambda b, qi: (b, qi, 0)),
        scratch_shapes=[
            pltpu.VMEM((S, D), mxu_dtype),        # projected Q (pre-scaled)
            pltpu.VMEM((S, D), mxu_dtype),        # projected K
            pltpu.VMEM((S, D), mxu_dtype),        # projected V
            pltpu.VMEM((tq, D), mxu_dtype),       # per-head output staging
        ],
        # batch axis parallel (megacore); q axis arbitrary because the
        # projected Q/K/V scratch is carried across q tiles (qi == 0 init).
        compiler_params=pltpu.CompilerParams(
            dimension_semantics=("parallel", "arbitrary"),
            vmem_limit_bytes=vmem_limit),
    )(query, key, value, wqkv, bqkv, wo, bo, maskf)


# ---------------------------------------------------------------------------
# Pure-JAX reference (mirrors the PyTorch code, dropout = identity)
# ---------------------------------------------------------------------------
def reference_mha(params, query, key, value, mask, h):
    B, S, D = query.shape
    d_k = D // h

    def lin(x, w, b):
        return x @ w.T + b

    def split(x):
        return x.reshape(B, S, h, d_k).transpose(0, 2, 1, 3)

    q = split(lin(query, params["wq"], params["bq"]))
    k = split(lin(key, params["wk"], params["bk"]))
    v = split(lin(value, params["wv"], params["bv"]))

    scores = (q @ jnp.swapaxes(k, -2, -1)) / math.sqrt(d_k)
    scores = jnp.where(mask[:, None, None, :] == 0, -1e9, scores)
    p = jax.nn.softmax(scores, axis=-1)
    x = (p @ v).transpose(0, 2, 1, 3).reshape(B, S, D)
    return lin(x, params["wo"], params["bo"])


# ---------------------------------------------------------------------------
# Main
# ---------------------------------------------------------------------------
if __name__ == "__main__":
    # SMALL demo shapes (see perf notes: realistic shapes need S >= 512 and
    # D a multiple of 128 for the MXU/VMEM effects to be measurable).
    B, S, D, H = 2, 16, 32, 4  # batch, seq, d_model, heads

    key0 = jax.random.PRNGKey(0)
    keys = jax.random.split(key0, 12)
    init_scale = 1.0 / math.sqrt(D)

    # PyTorch nn.Linear weight layout: (out_features, in_features).
    params = {
        "wq": jax.random.uniform(keys[0], (D, D), jnp.float32, -init_scale, init_scale),
        "bq": jax.random.uniform(keys[1], (D,), jnp.float32, -init_scale, init_scale),
        "wk": jax.random.uniform(keys[2], (D, D), jnp.float32, -init_scale, init_scale),
        "bk": jax.random.uniform(keys[3], (D,), jnp.float32, -init_scale, init_scale),
        "wv": jax.random.uniform(keys[4], (D, D), jnp.float32, -init_scale, init_scale),
        "bv": jax.random.uniform(keys[5], (D,), jnp.float32, -init_scale, init_scale),
        "wo": jax.random.uniform(keys[6], (D, D), jnp.float32, -init_scale, init_scale),
        "bo": jax.random.uniform(keys[7], (D,), jnp.float32, -init_scale, init_scale),
    }

    query = jax.random.normal(keys[8], (B, S, D), jnp.float32)
    key_in = jax.random.normal(keys[9], (B, S, D), jnp.float32)
    value = jax.random.normal(keys[10], (B, S, D), jnp.float32)

    # mask: first batch attends to 10 tokens, second to all 16
    lengths = jnp.array([10, 16], dtype=jnp.int32)
    mask = (jnp.arange(S)[None, :] < lengths[:, None]).astype(jnp.int32)  # (B, S)

    ref_out = reference_mha(params, query, key_in, value, mask, H)

    # 1) fp32 MXU path (exact module semantics).
    out_f32 = multi_headed_attention(params, query, key_in, value, mask, H,
                                     mxu_dtype=jnp.float32)
    out_f32 = jax.block_until_ready(out_f32)
    np.testing.assert_allclose(np.asarray(out_f32), np.asarray(ref_out),
                               rtol=1e-4, atol=1e-4)

    # 2) default bf16-MXU fast path (bf16 operands, fp32 accumulation/softmax).
    out_bf16 = multi_headed_attention(params, query, key_in, value, mask, H)
    out_bf16 = jax.block_until_ready(out_bf16)
    np.testing.assert_allclose(np.asarray(out_bf16), np.asarray(ref_out),
                               rtol=1e-1, atol=1e-1)

    # 3) q-row-tiled path (2 q tiles) — exercises the qi > 0 scratch-carry branch.
    out_tiled = multi_headed_attention(params, query, key_in, value, mask, H,
                                       mxu_dtype=jnp.float32, q_block=8)
    out_tiled = jax.block_until_ready(out_tiled)
    np.testing.assert_allclose(np.asarray(out_tiled), np.asarray(ref_out),
                               rtol=1e-4, atol=1e-4)

    # 4) self-attention fast path (query is key is value -> fused QKV matmul).
    ref_self = reference_mha(params, query, query, query, mask, H)
    out_self = multi_headed_attention(params, query, query, query, mask, H,
                                      mxu_dtype=jnp.float32)
    out_self = jax.block_until_ready(out_self)
    np.testing.assert_allclose(np.asarray(out_self), np.asarray(ref_self),
                               rtol=1e-4, atol=1e-4)

    print("KERNEL_OK")
</pallas_src>

<mosaic_0001>
module attributes {stable_mosaic.version = 11 : i64} {
  func.func @_mha_fused_kernel(%arg0: i32, %arg1: i32, %arg2: memref<1x16x32xf32, #tpu.memory_space<vmem>>, %arg3: memref<1x16x32xf32, #tpu.memory_space<vmem>>, %arg4: memref<1x16x32xf32, #tpu.memory_space<vmem>>, %arg5: memref<32x96xf32, #tpu.memory_space<vmem>>, %arg6: memref<1x96xf32, #tpu.memory_space<vmem>>, %arg7: memref<32x32xf32, #tpu.memory_space<vmem>>, %arg8: memref<1x32xf32, #tpu.memory_space<vmem>>, %arg9: memref<1x1x16xf32, #tpu.memory_space<vmem>>, %arg10: memref<1x16x32xf32, #tpu.memory_space<vmem>>, %arg11: memref<16x32xf32, #tpu.memory_space<vmem>>, %arg12: memref<16x32xf32, #tpu.memory_space<vmem>>, %arg13: memref<16x32xf32, #tpu.memory_space<vmem>>, %arg14: memref<16x32xf32, #tpu.memory_space<vmem>>) attributes {dimension_semantics = [#tpu.dimension_semantics<parallel>, #tpu.dimension_semantics<arbitrary>], iteration_bounds = array<i64: 2, 1>, scalar_prefetch = 0 : i64, scratch_operands = 4 : i64, tpu.core_type = #tpu.core_type<tc>, window_params = [{transform_indices = @transform_0, window_bounds = array<i64: 1, 16, 32>}, {transform_indices = @transform_1, window_bounds = array<i64: 1, 16, 32>}, {transform_indices = @transform_2, window_bounds = array<i64: 1, 16, 32>}, {pipeline_mode = #tpu.pipeline_mode<synchronous>, transform_indices = @transform_3, window_bounds = array<i64: 32, 96>}, {pipeline_mode = #tpu.pipeline_mode<synchronous>, transform_indices = @transform_4, window_bounds = array<i64: 1, 96>}, {pipeline_mode = #tpu.pipeline_mode<synchronous>, transform_indices = @transform_5, window_bounds = array<i64: 32, 32>}, {pipeline_mode = #tpu.pipeline_mode<synchronous>, transform_indices = @transform_6, window_bounds = array<i64: 1, 32>}, {transform_indices = @transform_7, window_bounds = array<i64: 1, 1, 16>}, {transform_indices = @transform_8, window_bounds = array<i64: 1, 16, 32>}]} {
    %c0_i32 = arith.constant 0 : i32
    %0 = arith.cmpi eq, %arg1, %c0_i32 : i32
    %1 = arith.extui %0 : i1 to i32
    %c0_i32_0 = arith.constant 0 : i32
    %2 = arith.cmpi ne, %1, %c0_i32_0 : i32
    scf.if %2 {
      %c0_43 = arith.constant 0 : index
      %c0_44 = arith.constant 0 : index
      %96 = vector.load %arg6[%c0_43, %c0_44] : memref<1x96xf32, #tpu.memory_space<vmem>>, vector<1x96xf32>
      %c0_45 = arith.constant 0 : index
      %c0_46 = arith.constant 0 : index
      %c0_47 = arith.constant 0 : index
      %97 = vector.load %arg2[%c0_45, %c0_46, %c0_47] : memref<1x16x32xf32, #tpu.memory_space<vmem>>, vector<1x16x32xf32>
      %98 = vector.shape_cast %97 : vector<1x16x32xf32> to vector<16x32xf32>
      %c0_48 = arith.constant 0 : index
      %c0_49 = arith.constant 0 : index
      %99 = vector.load %arg5[%c0_48, %c0_49] : memref<32x96xf32, #tpu.memory_space<vmem>>, vector<32x32xf32>
      %cst_50 = arith.constant dense<0.000000e+00> : vector<16x32xf32>
      %100 = tpu.matmul %98, %99, %cst_50 {dimension_numbers = #tpu.dot_dimension_numbers<[1], [0], [0], [1], [0, 0, 1, 1], [], []>} : vector<16x32xf32>, vector<32x32xf32>, vector<16x32xf32> -> vector<16x32xf32>
      %101 = vector.extract_strided_slice %96 {offsets = [0, 0], sizes = [1, 32], strides = [1, 1]} : vector<1x96xf32> to vector<1x32xf32>
      %102 = vector.broadcast %101 : vector<1x32xf32> to vector<16x32xf32>
      %103 = arith.addf %100, %102 : vector<16x32xf32>
      %c0_51 = arith.constant 0 : index
      %c0_52 = arith.constant 0 : index
      %c0_53 = arith.constant 0 : index
      %104 = vector.load %arg3[%c0_51, %c0_52, %c0_53] : memref<1x16x32xf32, #tpu.memory_space<vmem>>, vector<1x16x32xf32>
      %105 = vector.shape_cast %104 : vector<1x16x32xf32> to vector<16x32xf32>
      %c0_54 = arith.constant 0 : index
      %c32 = arith.constant 32 : index
      %106 = vector.load %arg5[%c0_54, %c32] : memref<32x96xf32, #tpu.memory_space<vmem>>, vector<32x32xf32>
      %cst_55 = arith.constant dense<0.000000e+00> : vector<16x32xf32>
      %107 = tpu.matmul %105, %106, %cst_55 {dimension_numbers = #tpu.dot_dimension_numbers<[1], [0], [0], [1], [0, 0, 1, 1], [], []>} : vector<16x32xf32>, vector<32x32xf32>, vector<16x32xf32> -> vector<16x32xf32>
      %108 = vector.extract_strided_slice %96 {offsets = [0, 32], sizes = [1, 32], strides = [1, 1]} : vector<1x96xf32> to vector<1x32xf32>
      %109 = vector.broadcast %108 : vector<1x32xf32> to vector<16x32xf32>
      %110 = arith.addf %107, %109 : vector<16x32xf32>
      %c0_56 = arith.constant 0 : index
      %c0_57 = arith.constant 0 : index
      %c0_58 = arith.constant 0 : index
      %111 = vector.load %arg4[%c0_56, %c0_57, %c0_58] : memref<1x16x32xf32, #tpu.memory_space<vmem>>, vector<1x16x32xf32>
      %112 = vector.shape_cast %111 : vector<1x16x32xf32> to vector<16x32xf32>
      %c0_59 = arith.constant 0 : index
      %c64 = arith.constant 64 : index
      %113 = vector.load %arg5[%c0_59, %c64] : memref<32x96xf32, #tpu.memory_space<vmem>>, vector<32x32xf32>
      %cst_60 = arith.constant dense<0.000000e+00> : vector<16x32xf32>
      %114 = tpu.matmul %112, %113, %cst_60 {dimension_numbers = #tpu.dot_dimension_numbers<[1], [0], [0], [1], [0, 0, 1, 1], [], []>} : vector<16x32xf32>, vector<32x32xf32>, vector<16x32xf32> -> vector<16x32xf32>
      %115 = vector.extract_strided_slice %96 {offsets = [0, 64], sizes = [1, 32], strides = [1, 1]} : vector<1x96xf32> to vector<1x32xf32>
      %116 = vector.broadcast %115 : vector<1x32xf32> to vector<16x32xf32>
      %117 = arith.addf %114, %116 : vector<16x32xf32>
      %cst_61 = arith.constant 0.353553385 : f32
      %118 = vector.broadcast %cst_61 : f32 to vector<16x32xf32>
      %119 = arith.mulf %103, %118 : vector<16x32xf32>
      %c0_62 = arith.constant 0 : index
      %c0_63 = arith.constant 0 : index
      %120 = vector.load %arg11[%c0_62, %c0_63] : memref<16x32xf32, #tpu.memory_space<vmem>>, vector<16x32xf32>
      tpu.vector_store %arg11[%c0_62, %c0_63], %119 {strides = array<i32>} : memref<16x32xf32, #tpu.memory_space<vmem>>, vector<16x32xf32>,
      %c0_64 = arith.constant 0 : index
      %c0_65 = arith.constant 0 : index
      %121 = vector.load %arg12[%c0_64, %c0_65] : memref<16x32xf32, #tpu.memory_space<vmem>>, vector<16x32xf32>
      tpu.vector_store %arg12[%c0_64, %c0_65], %110 {strides = array<i32>} : memref<16x32xf32, #tpu.memory_space<vmem>>, vector<16x32xf32>,
      %c0_66 = arith.constant 0 : index
      %c0_67 = arith.constant 0 : index
      %122 = vector.load %arg13[%c0_66, %c0_67] : memref<16x32xf32, #tpu.memory_space<vmem>>, vector<16x32xf32>
      tpu.vector_store %arg13[%c0_66, %c0_67], %117 {strides = array<i32>} : memref<16x32xf32, #tpu.memory_space<vmem>>, vector<16x32xf32>,
    } else {
    }
    %c16_i32 = arith.constant 16 : i32
    %3 = arith.muli %arg1, %c16_i32 : i32
    %4 = tpu.assume_multiple %3, 16 : i32
    %5 = arith.index_cast %4 : i32 to index
    %c0 = arith.constant 0 : index
    %6 = vector.load %arg11[%5, %c0] : memref<16x32xf32, #tpu.memory_space<vmem>>, vector<16x32xf32>
    %c0_1 = arith.constant 0 : index
    %c0_2 = arith.constant 0 : index
    %7 = vector.load %arg12[%c0_1, %c0_2] : memref<16x32xf32, #tpu.memory_space<vmem>>, vector<16x32xf32>
    %c0_3 = arith.constant 0 : index
    %c0_4 = arith.constant 0 : index
    %8 = vector.load %arg13[%c0_3, %c0_4] : memref<16x32xf32, #tpu.memory_space<vmem>>, vector<16x32xf32>
    %c0_5 = arith.constant 0 : index
    %c0_6 = arith.constant 0 : index
    %c0_7 = arith.constant 0 : index
    %9 = vector.load %arg9[%c0_5, %c0_6, %c0_7] : memref<1x1x16xf32, #tpu.memory_space<vmem>>, vector<1x1x16xf32>
    %10 = vector.shape_cast %9 : vector<1x1x16xf32> to vector<1x16xf32>
    %11 = vector.shape_cast %10 : vector<1x16xf32> to vector<1x16xf32>
    %12 = vector.broadcast %11 : vector<1x16xf32> to vector<16x16xf32>
    %cst = arith.constant 0.000000e+00 : f32
    %13 = vector.broadcast %cst : f32 to vector<16x16xf32>
    %14 = arith.cmpf oeq, %12, %13 : vector<16x16xf32>
    %15 = vector.extract_strided_slice %6 {offsets = [0, 0], sizes = [16, 8], strides = [1, 1]} : vector<16x32xf32> to vector<16x8xf32>
    %16 = vector.extract_strided_slice %7 {offsets = [0, 0], sizes = [16, 8], strides = [1, 1]} : vector<16x32xf32> to vector<16x8xf32>
    %cst_8 = arith.constant dense<0.000000e+00> : vector<16x16xf32>
    %17 = tpu.matmul %15, %16, %cst_8 {dimension_numbers = #tpu.dot_dimension_numbers<[1], [1], [0], [0], [0, 0, 1, 0], [], []>} : vector<16x8xf32>, vector<16x8xf32>, vector<16x16xf32> -> vector<16x16xf32>
    %cst_9 = arith.constant -1.000000e+09 : f32
    %18 = vector.broadcast %cst_9 : f32 to vector<16x16xf32>
    %19 = arith.select %14, %18, %17 : vector<16x16xi1>, vector<16x16xf32>
    %cst_10 = arith.constant dense<0xFF800000> : vector<16xf32>
    %20 = vector.multi_reduction <maximumf>, %19, %cst_10 [1] : vector<16x16xf32> to vector<16xf32>
    %21 = vector.shape_cast %20 : vector<16xf32> to vector<16x1xf32>
    %22 = vector.broadcast %21 : vector<16x1xf32> to vector<16x16xf32>
    %23 = arith.subf %19, %22 : vector<16x16xf32>
    %24 = math.exp %23 : vector<16x16xf32>
    %cst_11 = arith.constant dense<0.000000e+00> : vector<16xf32>
    %25 = vector.multi_reduction <add>, %24, %cst_11 [1] : vector<16x16xf32> to vector<16xf32>
    %26 = vector.shape_cast %25 : vector<16xf32> to vector<16x1xf32>
    %27 = vector.extract_strided_slice %8 {offsets = [0, 0], sizes = [16, 8], strides = [1, 1]} : vector<16x32xf32> to vector<16x8xf32>
    %cst_12 = arith.constant dense<0.000000e+00> : vector<16x8xf32>
    %28 = tpu.matmul %24, %27, %cst_12 {dimension_numbers = #tpu.dot_dimension_numbers<[1], [0], [0], [1], [0, 0, 1, 1], [], []>} : vector<16x16xf32>, vector<16x8xf32>, vector<16x8xf32> -> vector<16x8xf32>
    %29 = tpu.reciprocal %26 : vector<16x1xf32> -> vector<16x1xf32>
    %30 = vector.broadcast %29 : vector<16x1xf32> to vector<16x8xf32>
    %31 = arith.mulf %28, %30 : vector<16x8xf32>
    %c0_13 = arith.constant 0 : index
    %c0_14 = arith.constant 0 : index
    %32 = vector.load %arg14[%c0_13, %c0_14] : memref<16x32xf32, #tpu.memory_space<vmem>>, vector<16x8xf32>
    tpu.vector_store %arg14[%c0_13, %c0_14], %31 {strides = array<i32>} : memref<16x32xf32, #tpu.memory_space<vmem>>, vector<16x8xf32>,
    %33 = vector.extract_strided_slice %6 {offsets = [0, 8], sizes = [16, 8], strides = [1, 1]} : vector<16x32xf32> to vector<16x8xf32>
    %34 = vector.extract_strided_slice %7 {offsets = [0, 8], sizes = [16, 8], strides = [1, 1]} : vector<16x32xf32> to vector<16x8xf32>
    %cst_15 = arith.constant dense<0.000000e+00> : vector<16x16xf32>
    %35 = tpu.matmul %33, %34, %cst_15 {dimension_numbers = #tpu.dot_dimension_numbers<[1], [1], [0], [0], [0, 0, 1, 0], [], []>} : vector<16x8xf32>, vector<16x8xf32>, vector<16x16xf32> -> vector<16x16xf32>
    %cst_16 = arith.constant -1.000000e+09 : f32
    %36 = vector.broadcast %cst_16 : f32 to vector<16x16xf32>
    %37 = arith.select %14, %36, %35 : vector<16x16xi1>, vector<16x16xf32>
    %cst_17 = arith.constant dense<0xFF800000> : vector<16xf32>
    %38 = vector.multi_reduction <maximumf>, %37, %cst_17 [1] : vector<16x16xf32> to vector<16xf32>
    %39 = vector.shape_cast %38 : vector<16xf32> to vector<16x1xf32>
    %40 = vector.broadcast %39 : vector<16x1xf32> to vector<16x16xf32>
    %41 = arith.subf %37, %40 : vector<16x16xf32>
    %42 = math.exp %41 : vector<16x16xf32>
    %cst_18 = arith.constant dense<0.000000e+00> : vector<16xf32>
    %43 = vector.multi_reduction <add>, %42, %cst_18 [1] : vector<16x16xf32> to vector<16xf32>
    %44 = vector.shape_cast %43 : vector<16xf32> to vector<16x1xf32>
    %45 = vector.extract_strided_slice %8 {offsets = [0, 8], sizes = [16, 8], strides = [1, 1]} : vector<16x32xf32> to vector<16x8xf32>
    %cst_19 = arith.constant dense<0.000000e+00> : vector<16x8xf32>
    %46 = tpu.matmul %42, %45, %cst_19 {dimension_numbers = #tpu.dot_dimension_numbers<[1], [0], [0], [1], [0, 0, 1, 1], [], []>} : vector<16x16xf32>, vector<16x8xf32>, vector<16x8xf32> -> vector<16x8xf32>
    %47 = tpu.reciprocal %44 : vector<16x1xf32> -> vector<16x1xf32>
    %48 = vector.broadcast %47 : vector<16x1xf32> to vector<16x8xf32>
    %49 = arith.mulf %46, %48 : vector<16x8xf32>
    %c0_20 = arith.constant 0 : index
    %c8 = arith.constant 8 : index
    %50 = vector.load %arg14[%c0_20, %c8] : memref<16x32xf32, #tpu.memory_space<vmem>>, vector<16x8xf32>
    tpu.vector_store %arg14[%c0_20, %c8], %49 {strides = array<i32>} : memref<16x32xf32, #tpu.memory_space<vmem>>, vector<16x8xf32>,
    %51 = vector.extract_strided_slice %6 {offsets = [0, 16], sizes = [16, 8], strides = [1, 1]} : vector<16x32xf32> to vector<16x8xf32>
    %52 = vector.extract_strided_slice %7 {offsets = [0, 16], sizes = [16, 8], strides = [1, 1]} : vector<16x32xf32> to vector<16x8xf32>
    %cst_21 = arith.constant dense<0.000000e+00> : vector<16x16xf32>
    %53 = tpu.matmul %51, %52, %cst_21 {dimension_numbers = #tpu.dot_dimension_numbers<[1], [1], [0], [0], [0, 0, 1, 0], [], []>} : vector<16x8xf32>, vector<16x8xf32>, vector<16x16xf32> -> vector<16x16xf32>
    %cst_22 = arith.constant -1.000000e+09 : f32
    %54 = vector.broadcast %cst_22 : f32 to vector<16x16xf32>
    %55 = arith.select %14, %54, %53 : vector<16x16xi1>, vector<16x16xf32>
    %cst_23 = arith.constant dense<0xFF800000> : vector<16xf32>
    %56 = vector.multi_reduction <maximumf>, %55, %cst_23 [1] : vector<16x16xf32> to vector<16xf32>
    %57 = vector.shape_cast %56 : vector<16xf32> to vector<16x1xf32>
    %58 = vector.broadcast %57 : vector<16x1xf32> to vector<16x16xf32>
    %59 = arith.subf %55, %58 : vector<16x16xf32>
    %60 = math.exp %59 : vector<16x16xf32>
    %cst_24 = arith.constant dense<0.000000e+00> : vector<16xf32>
    %61 = vector.multi_reduction <add>, %60, %cst_24 [1] : vector<16x16xf32> to vector<16xf32>
    %62 = vector.shape_cast %61 : vector<16xf32> to vector<16x1xf32>
    %63 = vector.extract_strided_slice %8 {offsets = [0, 16], sizes = [16, 8], strides = [1, 1]} : vector<16x32xf32> to vector<16x8xf32>
    %cst_25 = arith.constant dense<0.000000e+00> : vector<16x8xf32>
    %64 = tpu.matmul %60, %63, %cst_25 {dimension_numbers = #tpu.dot_dimension_numbers<[1], [0], [0], [1], [0, 0, 1, 1], [], []>} : vector<16x16xf32>, vector<16x8xf32>, vector<16x8xf32> -> vector<16x8xf32>
    %65 = tpu.reciprocal %62 : vector<16x1xf32> -> vector<16x1xf32>
    %66 = vector.broadcast %65 : vector<16x1xf32> to vector<16x8xf32>
    %67 = arith.mulf %64, %66 : vector<16x8xf32>
    %c0_26 = arith.constant 0 : index
    %c16 = arith.constant 16 : index
    %68 = vector.load %arg14[%c0_26, %c16] : memref<16x32xf32, #tpu.memory_space<vmem>>, vector<16x8xf32>
    tpu.vector_store %arg14[%c0_26, %c16], %67 {strides = array<i32>} : memref<16x32xf32, #tpu.memory_space<vmem>>, vector<16x8xf32>,
    %69 = vector.extract_strided_slice %6 {offsets = [0, 24], sizes = [16, 8], strides = [1, 1]} : vector<16x32xf32> to vector<16x8xf32>
    %70 = vector.extract_strided_slice %7 {offsets = [0, 24], sizes = [16, 8], strides = [1, 1]} : vector<16x32xf32> to vector<16x8xf32>
    %cst_27 = arith.constant dense<0.000000e+00> : vector<16x16xf32>
    %71 = tpu.matmul %69, %70, %cst_27 {dimension_numbers = #tpu.dot_dimension_numbers<[1], [1], [0], [0], [0, 0, 1, 0], [], []>} : vector<16x8xf32>, vector<16x8xf32>, vector<16x16xf32> -> vector<16x16xf32>
    %cst_28 = arith.constant -1.000000e+09 : f32
    %72 = vector.broadcast %cst_28 : f32 to vector<16x16xf32>
    %73 = arith.select %14, %72, %71 : vector<16x16xi1>, vector<16x16xf32>
    %cst_29 = arith.constant dense<0xFF800000> : vector<16xf32>
    %74 = vector.multi_reduction <maximumf>, %73, %cst_29 [1] : vector<16x16xf32> to vector<16xf32>
    %75 = vector.shape_cast %74 : vector<16xf32> to vector<16x1xf32>
    %76 = vector.broadcast %75 : vector<16x1xf32> to vector<16x16xf32>
    %77 = arith.subf %73, %76 : vector<16x16xf32>
    %78 = math.exp %77 : vector<16x16xf32>
    %cst_30 = arith.constant dense<0.000000e+00> : vector<16xf32>
    %79 = vector.multi_reduction <add>, %78, %cst_30 [1] : vector<16x16xf32> to vector<16xf32>
    %80 = vector.shape_cast %79 : vector<16xf32> to vector<16x1xf32>
    %81 = vector.extract_strided_slice %8 {offsets = [0, 24], sizes = [16, 8], strides = [1, 1]} : vector<16x32xf32> to vector<16x8xf32>
    %cst_31 = arith.constant dense<0.000000e+00> : vector<16x8xf32>
    %82 = tpu.matmul %78, %81, %cst_31 {dimension_numbers = #tpu.dot_dimension_numbers<[1], [0], [0], [1], [0, 0, 1, 1], [], []>} : vector<16x16xf32>, vector<16x8xf32>, vector<16x8xf32> -> vector<16x8xf32>
    %83 = tpu.reciprocal %80 : vector<16x1xf32> -> vector<16x1xf32>
    %84 = vector.broadcast %83 : vector<16x1xf32> to vector<16x8xf32>
    %85 = arith.mulf %82, %84 : vector<16x8xf32>
    %c0_32 = arith.constant 0 : index
    %c24 = arith.constant 24 : index
    %86 = vector.load %arg14[%c0_32, %c24] : memref<16x32xf32, #tpu.memory_space<vmem>>, vector<16x8xf32>
    tpu.vector_store %arg14[%c0_32, %c24], %85 {strides = array<i32>} : memref<16x32xf32, #tpu.memory_space<vmem>>, vector<16x8xf32>,
    %c0_33 = arith.constant 0 : index
    %c0_34 = arith.constant 0 : index
    %87 = vector.load %arg14[%c0_33, %c0_34] : memref<16x32xf32, #tpu.memory_space<vmem>>, vector<16x32xf32>
    %c0_35 = arith.constant 0 : index
    %c0_36 = arith.constant 0 : index
    %88 = vector.load %arg7[%c0_35, %c0_36] : memref<32x32xf32, #tpu.memory_space<vmem>>, vector<32x32xf32>
    %cst_37 = arith.constant dense<0.000000e+00> : vector<16x32xf32>
    %89 = tpu.matmul %87, %88, %cst_37 {dimension_numbers = #tpu.dot_dimension_numbers<[1], [0], [0], [1], [0, 0, 1, 1], [], []>} : vector<16x32xf32>, vector<32x32xf32>, vector<16x32xf32> -> vector<16x32xf32>
    %c0_38 = arith.constant 0 : index
    %c0_39 = arith.constant 0 : index
    %90 = vector.load %arg8[%c0_38, %c0_39] : memref<1x32xf32, #tpu.memory_space<vmem>>, vector<1x32xf32>
    %91 = vector.broadcast %90 : vector<1x32xf32> to vector<16x32xf32>
    %92 = arith.addf %89, %91 : vector<16x32xf32>
    %c0_40 = arith.constant 0 : index
    %c0_41 = arith.constant 0 : index
    %c0_42 = arith.constant 0 : index
    %93 = vector.load %arg10[%c0_40, %c0_41, %c0_42] : memref<1x16x32xf32, #tpu.memory_space<vmem>>, vector<1x16x32xf32>
    %94 = vector.shape_cast %93 : vector<1x16x32xf32> to vector<16x32xf32>
    %95 = vector.shape_cast %92 : vector<16x32xf32> to vector<1x16x32xf32>
    tpu.vector_store %arg10[%c0_40, %c0_41, %c0_42], %95 {strides = array<i32>} : memref<1x16x32xf32, #tpu.memory_space<vmem>>, vector<1x16x32xf32>,
    return
  }
  func.func @transform_0(%arg0: i32, %arg1: i32) -> (i32, i32, i32) {
    %c0_i32 = arith.constant 0 : i32
    %c0_i32_0 = arith.constant 0 : i32
    %c0_i32_1 = arith.constant 0 : i32
    return %arg0, %c0_i32, %c0_i32_0 : i32, i32, i32
  }
  func.func @transform_1(%arg0: i32, %arg1: i32) -> (i32, i32, i32) {
    %c0_i32 = arith.constant 0 : i32
    %c0_i32_0 = arith.constant 0 : i32
    %c0_i32_1 = arith.constant 0 : i32
    return %arg0, %c0_i32, %c0_i32_0 : i32, i32, i32
  }
  func.func @transform_2(%arg0: i32, %arg1: i32) -> (i32, i32, i32) {
    %c0_i32 = arith.constant 0 : i32
    %c0_i32_0 = arith.constant 0 : i32
    %c0_i32_1 = arith.constant 0 : i32
    return %arg0, %c0_i32, %c0_i32_0 : i32, i32, i32
  }
  func.func @transform_3(%arg0: i32, %arg1: i32) -> (i32, i32) {
    %c0_i32 = arith.constant 0 : i32
    %c0_i32_0 = arith.constant 0 : i32
    %c0_i32_1 = arith.constant 0 : i32
    return %c0_i32, %c0_i32_0 : i32, i32
  }
  func.func @transform_4(%arg0: i32, %arg1: i32) -> (i32, i32) {
    %c0_i32 = arith.constant 0 : i32
    %c0_i32_0 = arith.constant 0 : i32
    %c0_i32_1 = arith.constant 0 : i32
    return %c0_i32, %c0_i32_0 : i32, i32
  }
  func.func @transform_5(%arg0: i32, %arg1: i32) -> (i32, i32) {
    %c0_i32 = arith.constant 0 : i32
    %c0_i32_0 = arith.constant 0 : i32
    %c0_i32_1 = arith.constant 0 : i32
    return %c0_i32, %c0_i32_0 : i32, i32
  }
  func.func @transform_6(%arg0: i32, %arg1: i32) -> (i32, i32) {
    %c0_i32 = arith.constant 0 : i32
    %c0_i32_0 = arith.constant 0 : i32
    %c0_i32_1 = arith.constant 0 : i32
    return %c0_i32, %c0_i32_0 : i32, i32
  }
  func.func @transform_7(%arg0: i32, %arg1: i32) -> (i32, i32, i32) {
    %c0_i32 = arith.constant 0 : i32
    %c0_i32_0 = arith.constant 0 : i32
    %c0_i32_1 = arith.constant 0 : i32
    return %arg0, %c0_i32, %c0_i32_0 : i32, i32, i32
  }
  func.func @transform_8(%arg0: i32, %arg1: i32) -> (i32, i32, i32) {
    %c0_i32 = arith.constant 0 : i32
    %c0_i32_0 = arith.constant 0 : i32
    return %arg0, %arg1, %c0_i32 : i32, i32, i32
  }
}

</mosaic_0001>

<llo_original>
// kernel: tpu_custom_call.1
$region0: #{tpu_custom_call.1}
  #allocation0 [shape = 'u32[]', space=smem, size = 0x4, offset = 0x4, fixed_abs, tag = 'smem constant byte address 0x4 - core index']
  #allocation1 [shape = 'u32[72,128]{1,0:T(1,128)}', space=vmem, size = 0x9000, scoped, tag = 'internal scratch']
  #allocation2 [shape = 'f32[16,32]{1,0:T(8,128)}', space=vmem, size = 0x2000, scoped, tag = 'scratch operand']
  #allocation3 [shape = 'f32[16,32]{1,0:T(8,128)}', space=vmem, size = 0x2000, scoped, tag = 'scratch operand']
  #allocation4 [shape = 'f32[16,32]{1,0:T(8,128)}', space=vmem, size = 0x2000, scoped, tag = 'scratch operand']
  #allocation5 [shape = 'f32[16,32]{1,0:T(8,128)}', space=vmem, size = 0x2000, scoped, tag = 'scratch operand']
  %s0 = inlined_call_operand.hbm [shape: f32[2,16,32], index: 0, kind: input, shape index: {}]
  %s1 = inlined_call_operand.hbm [shape: f32[2,16,32], index: 1, kind: input, shape index: {}]
  %s2 = inlined_call_operand.hbm [shape: f32[2,16,32], index: 2, kind: input, shape index: {}]
  %s3 = inlined_call_operand.hbm [shape: f32[32,96], index: 3, kind: input, shape index: {}]
  %s4 = inlined_call_operand.vmem [shape: f32[1,96], index: 4, kind: input, shape index: {}]
  %s5 = inlined_call_operand.hbm [shape: f32[32,32], index: 5, kind: input, shape index: {}]
  %s6 = inlined_call_operand.vmem [shape: f32[1,32], index: 6, kind: input, shape index: {}]
  %s7 = inlined_call_operand.vmem [shape: f32[2,1,16], index: 7, kind: input, shape index: {}]
  %s8 = inlined_call_operand.hbm [shape: f32[2,16,32], index: 8, kind: output, shape index: {}]
  %s9 = sld [smem:[#allocation0]]
  $region89: #{tpu_custom_call.1} parent=0
    _
  %s11 = ssub.s32 1, %s9
  %s12 = scalar_select 0, %s11, %s9
  $region1: #{tpu_custom_call.1} parent=0
    #allocation6 [shape = 'u8[16384]{0}', space=vmem, size = 0x4000, scoped, tag = 'input window, operand 0']
    #allocation7 [shape = 's32[2]{0}', space=sflag, size = 0x8, scoped, tag = 'scoped memory for tpu_custom_call.1']
    #allocation8 [shape = 's32[2]{0}', space=sflag, size = 0x8, scoped, tag = 'scoped memory for tpu_custom_call.1']
    #allocation9 [shape = 'u8[16384]{0}', space=vmem, size = 0x4000, scoped, tag = 'input window, operand 1']
    #allocation10 [shape = 's32[2]{0}', space=sflag, size = 0x8, scoped, tag = 'scoped memory for tpu_custom_call.1']
    #allocation11 [shape = 'u8[16384]{0}', space=vmem, size = 0x4000, scoped, tag = 'input window, operand 2']
    #allocation12 [shape = 'u8[16384]{0}', space=vmem, size = 0x4000, scoped, tag = 'input window, operand 3, single buffered']
    #allocation13 [shape = 's32[1]{0}', space=sflag, size = 0x4, scoped, tag = 'scoped memory for tpu_custom_call.1']
    #allocation14 [shape = 'u8[16384]{0}', space=vmem, size = 0x4000, scoped, tag = 'input window, operand 5, single buffered']
    #allocation15 [shape = 'u8[16384]{0}', space=vmem, size = 0x4000, scoped, tag = 'output window, operand 0']
    %13 = vsyncpa [#allocation7], 0
    %s14 = scalar_lea.sflag [#allocation7], 1
    %15 = vsyncpa %s14, 0
    %16 = vsyncpa [#allocation10], 0
    %s17 = scalar_lea.sflag [#allocation10], 1
    %18 = vsyncpa %s17, 0
    %19 = vsyncpa [#allocation13], 0
    %20 = vsyncpa [#allocation8], 0
    %s21 = scalar_lea.sflag [#allocation8], 1
    %22 = vsyncpa %s21, 0
    loop: start=0, step=1, limit=4
    $region2: #{tpu_custom_call.1} parent=1 // loop_pre_header
      _
    $region3: #{tpu_custom_call.1} parent=1 // loop_header
      %s24 = sphi 0, %s28
      %p25 = scmp.ge.s32.totalorder %s24, 4
      %s31 = sphi 0, %s43
      %s32 = sphi 0, %s39
      %s33 = sphi 0, %s31
      %s34 = sphi 0, %s32
      %s35 = sphi 0, %s33
      %s36 = sphi 0, %s34
      %s46 = sphi 0, %s48
      %s49 = sphi 0, %s46
      %s50 = sphi 0, %s49
      %s66 = sphi 0, %s50
      %s72 = sphi 0, %s74
      %s75 = sphi 0, %s72
      %s76 = sphi 0, %s75
      %s92 = sphi 0, %s76
      %s98 = sphi 0, %s100
      %s101 = sphi 0, %s98
      %s102 = sphi 0, %s101
      %s118 = sphi 0, %s102
      %s122 = sphi 0, %s122
      %s124 = sphi 0, %s122
      %s125 = sphi 0, %s124
      %s139 = sphi 0, %s125
      %s143 = sphi 0, %s143
      %s145 = sphi 0, %s143
      %s146 = sphi 0, %s145
      %s160 = sphi 0, %s146
      %s164 = sphi 0, %s164
      %s166 = sphi 0, %s164
      %s167 = sphi 0, %s166
      %s181 = sphi 0, %s167
      %s185 = sphi 0, %s185
      %s187 = sphi 0, %s185
      %s188 = sphi 0, %s187
      %s202 = sphi 0, %s188
      %s208 = sphi 0, %s210
      %s211 = sphi 0, %s208
      %s212 = sphi 0, %s211
      %s228 = sphi 0, %s212
      %s236 = sphi 0, %s238
      %s239 = sphi 0, %s236
      %s240 = sphi 0, %s239
      %s256 = sphi 0, %s240
    $region4: #{tpu_custom_call.1} parent=1 // loop_header_branch
      %27 = sbr.rel (%p25) target = $region8
    $region5: #{tpu_custom_call.1} parent=1 // loop_body
      %s29 = ssub.s32 %s24, 1
      %s30 = ssub.s32 %s24, 2
      %s37 = sadd.s32 1, %s32
      %p38 = scmp.ge.s32.totalorder %s37, 1
      %s39 = scalar_select %p38, 0, %s37
      %s40 = sadd.s32 1, %s31
      %s41 = scalar_select %p38, %s40, %s31
      %p42 = scmp.ge.s32.totalorder %s41, 2
      %s43 = scalar_select %p42, 0, %s41
      %s44 = ssub.s32 %s31, %s43
      %p45 = scmp.eq.s32.totalorder %s44, 0
      %s47 = sadd.s32 %s46, 1
      %s48 = scalar_select %p45, %s46, %s47
      %p51 = pneg %p45
      %p52 = scmp.eq.s32.totalorder %s24, 1
      %p53 = por %p51, %p52
      %p54 = scmp.ne.s32.totalorder %s46, %s49
      %p55 = scmp.eq.s32.totalorder %s24, 0
      %p56 = por %p54, %p55
      %p57 = scmp.ne.s32.totalorder %s46, %s49
      %p58 = scmp.eq.s32.totalorder %s29, 1
      %p59 = por %p57, %p58
      %p60 = scmp.ne.s32.totalorder %s49, %s50
      %p61 = scmp.eq.s32.totalorder %s29, 0
      %p62 = por %p60, %p61
      %p63 = scmp.ne.s32.totalorder %s49, %s50
      %p64 = scmp.eq.s32.totalorder %s30, 1
      %p65 = por %p63, %p64
      %p67 = scmp.ne.s32.totalorder %s50, %s66
      %p68 = scmp.eq.s32.totalorder %s30, 0
      %p69 = por %p67, %p68
      %s70 = ssub.s32 %s31, %s43
      %p71 = scmp.eq.s32.totalorder %s70, 0
      %s73 = sadd.s32 %s72, 1
      %s74 = scalar_select %p71, %s72, %s73
      %p77 = pneg %p71
      %p78 = scmp.eq.s32.totalorder %s24, 1
      %p79 = por %p77, %p78
      %p80 = scmp.ne.s32.totalorder %s72, %s75
      %p81 = scmp.eq.s32.totalorder %s24, 0
      %p82 = por %p80, %p81
      %p83 = scmp.ne.s32.totalorder %s72, %s75
      %p84 = scmp.eq.s32.totalorder %s29, 1
      %p85 = por %p83, %p84
      %p86 = scmp.ne.s32.totalorder %s75, %s76
      %p87 = scmp.eq.s32.totalorder %s29, 0
      %p88 = por %p86, %p87
      %p89 = scmp.ne.s32.totalorder %s75, %s76
      %p90 = scmp.eq.s32.totalorder %s30, 1
      %p91 = por %p89, %p90
      %p93 = scmp.ne.s32.totalorder %s76, %s92
      %p94 = scmp.eq.s32.totalorder %s30, 0
      %p95 = por %p93, %p94
      %s96 = ssub.s32 %s31, %s43
      %p97 = scmp.eq.s32.totalorder %s96, 0
      %s99 = sadd.s32 %s98, 1
      %s100 = scalar_select %p97, %s98, %s99
      %p103 = pneg %p97
      %p104 = scmp.eq.s32.totalorder %s24, 1
      %p105 = por %p103, %p104
      %p106 = scmp.ne.s32.totalorder %s98, %s101
      %p107 = scmp.eq.s32.totalorder %s24, 0
      %p108 = por %p106, %p107
      %p109 = scmp.ne.s32.totalorder %s98, %s101
      %p110 = scmp.eq.s32.totalorder %s29, 1
      %p111 = por %p109, %p110
      %p112 = scmp.ne.s32.totalorder %s101, %s102
      %p113 = scmp.eq.s32.totalorder %s29, 0
      %p114 = por %p112, %p113
      %p115 = scmp.ne.s32.totalorder %s101, %s102
      %p116 = scmp.eq.s32.totalorder %s30, 1
      %p117 = por %p115, %p116
      %p119 = scmp.ne.s32.totalorder %s102, %s118
      %p120 = scmp.eq.s32.totalorder %s30, 0
      %p121 = por %p119, %p120
      %s123 = sadd.s32 %s122, 1
      %p126 = scmp.eq.s32.totalorder %s24, 1
      %p127 = scmp.ne.s32.totalorder %s122, %s124
      %p128 = scmp.eq.s32.totalorder %s24, 0
      %p129 = por %p127, %p128
      %p130 = scmp.ne.s32.totalorder %s122, %s124
      %p131 = scmp.eq.s32.totalorder %s29, 1
      %p132 = por %p130, %p131
      %p133 = scmp.ne.s32.totalorder %s124, %s125
      %p134 = scmp.eq.s32.totalorder %s29, 0
      %p135 = por %p133, %p134
      %p136 = scmp.ne.s32.totalorder %s124, %s125
      %p137 = scmp.eq.s32.totalorder %s30, 1
      %p138 = por %p136, %p137
      %p140 = scmp.ne.s32.totalorder %s125, %s139
      %p141 = scmp.eq.s32.totalorder %s30, 0
      %p142 = por %p140, %p141
      %s144 = sadd.s32 %s143, 1
      %p147 = scmp.eq.s32.totalorder %s24, 1
      %p148 = scmp.ne.s32.totalorder %s143, %s145
      %p149 = scmp.eq.s32.totalorder %s24, 0
      %p150 = por %p148, %p149
      %p151 = scmp.ne.s32.totalorder %s143, %s145
      %p152 = scmp.eq.s32.totalorder %s29, 1
      %p153 = por %p151, %p152
      %p154 = scmp.ne.s32.totalorder %s145, %s146
      %p155 = scmp.eq.s32.totalorder %s29, 0
      %p156 = por %p154, %p155
      %p157 = scmp.ne.s32.totalorder %s145, %s146
      %p158 = scmp.eq.s32.totalorder %s30, 1
      %p159 = por %p157, %p158
      %p161 = scmp.ne.s32.totalorder %s146, %s160
      %p162 = scmp.eq.s32.totalorder %s30, 0
      %p163 = por %p161, %p162
      %s165 = sadd.s32 %s164, 1
      %p168 = scmp.eq.s32.totalorder %s24, 1
      %p169 = scmp.ne.s32.totalorder %s164, %s166
      %p170 = scmp.eq.s32.totalorder %s24, 0
      %p171 = por %p169, %p170
      %p172 = scmp.ne.s32.totalorder %s164, %s166
      %p173 = scmp.eq.s32.totalorder %s29, 1
      %p174 = por %p172, %p173
      %p175 = scmp.ne.s32.totalorder %s166, %s167
      %p176 = scmp.eq.s32.totalorder %s29, 0
      %p177 = por %p175, %p176
      %p178 = scmp.ne.s32.totalorder %s166, %s167
      %p179 = scmp.eq.s32.totalorder %s30, 1
      %p180 = por %p178, %p179
      %p182 = scmp.ne.s32.totalorder %s167, %s181
      %p183 = scmp.eq.s32.totalorder %s30, 0
      %p184 = por %p182, %p183
      %s186 = sadd.s32 %s185, 1
      %p189 = scmp.eq.s32.totalorder %s24, 1
      %p190 = scmp.ne.s32.totalorder %s185, %s187
      %p191 = scmp.eq.s32.totalorder %s24, 0
      %p192 = por %p190, %p191
      %p193 = scmp.ne.s32.totalorder %s185, %s187
      %p194 = scmp.eq.s32.totalorder %s29, 1
      %p195 = por %p193, %p194
      %p196 = scmp.ne.s32.totalorder %s187, %s188
      %p197 = scmp.eq.s32.totalorder %s29, 0
      %p198 = por %p196, %p197
      %p199 = scmp.ne.s32.totalorder %s187, %s188
      %p200 = scmp.eq.s32.totalorder %s30, 1
      %p201 = por %p199, %p200
      %p203 = scmp.ne.s32.totalorder %s188, %s202
      %p204 = scmp.eq.s32.totalorder %s30, 0
      %p205 = por %p203, %p204
      %s206 = ssub.s32 %s31, %s43
      %p207 = scmp.eq.s32.totalorder %s206, 0
      %s209 = sadd.s32 %s208, 1
      %s210 = scalar_select %p207, %s208, %s209
      %p213 = pneg %p207
      %p214 = scmp.eq.s32.totalorder %s24, 1
      %p215 = por %p213, %p214
      %p216 = scmp.ne.s32.totalorder %s208, %s211
      %p217 = scmp.eq.s32.totalorder %s24, 0
      %p218 = por %p216, %p217
      %p219 = scmp.ne.s32.totalorder %s208, %s211
      %p220 = scmp.eq.s32.totalorder %s29, 1
      %p221 = por %p219, %p220
      %p222 = scmp.ne.s32.totalorder %s211, %s212
      %p223 = scmp.eq.s32.totalorder %s29, 0
      %p224 = por %p222, %p223
      %p225 = scmp.ne.s32.totalorder %s211, %s212
      %p226 = scmp.eq.s32.totalorder %s30, 1
      %p227 = por %p225, %p226
      %p229 = scmp.ne.s32.totalorder %s212, %s228
      %p230 = scmp.eq.s32.totalorder %s30, 0
      %p231 = por %p229, %p230
      %s232 = ssub.s32 %s31, %s43
      %s233 = ssub.s32 %s32, %s39
      %s234 = sor.u32 %s232, %s233
      %p235 = scmp.eq.s32.totalorder %s234, 0
      %s237 = sadd.s32 %s236, 1
      %s238 = scalar_select %p235, %s236, %s237
      %p241 = pneg %p235
      %p242 = scmp.eq.s32.totalorder %s24, 1
      %p243 = por %p241, %p242
      %p244 = scmp.ne.s32.totalorder %s236, %s239
      %p245 = scmp.eq.s32.totalorder %s24, 0
      %p246 = por %p244, %p245
      %p247 = scmp.ne.s32.totalorder %s236, %s239
      %p248 = scmp.eq.s32.totalorder %s29, 1
      %p249 = por %p247, %p248
      %p250 = scmp.ne.s32.totalorder %s239, %s240
      %p251 = scmp.eq.s32.totalorder %s29, 0
      %p252 = por %p250, %p251
      %p253 = scmp.ne.s32.totalorder %s239, %s240
      %p254 = scmp.eq.s32.totalorder %s30, 1
      %p255 = por %p253, %p254
      %p257 = scmp.ne.s32.totalorder %s240, %s256
      %p258 = scmp.eq.s32.totalorder %s30, 0
      %p259 = por %p257, %p258
      %p260 = scmp.le.s32.totalorder 1, %s24
      %p261 = scmp.lt.s32.totalorder %s24, 3
      %p262 = pnand %p260, %p261
      %p263 = pneg %p262
      // Predicated region
      $region9: #{tpu_custom_call.1} parent=5 // pred_check
        _
      $region10: #{tpu_custom_call.1} parent=5 // pred_check_branch
        %265 = sbr.rel (%p262) target = $region12
      $region11: #{tpu_custom_call.1} parent=5 // pred_region
        %s266 = ssub.s32 %s24, 1
        // Predicated region
        $region13: #{tpu_custom_call.1} parent=11 // pred_check
          %p267 = pneg %p135
        $region14: #{tpu_custom_call.1} parent=11 // pred_check_branch
          %269 = sbr.rel (%p267) target = $region16
        $region15: #{tpu_custom_call.1} parent=11 // pred_region
          %271 = vsyncadd [#allocation13], 0
          %s272 = sshll.u32 %s3, 4
          %s273 = int_to_ptr.hbm [resolvable:$true] %s272
          %s274 = sshll.u32 [#allocation12], 4
          %s275 = int_to_ptr.vmem [resolvable:$true] %s274
          %280 = dma.hbm_to_vmem [thread:$0]  %s273, 512, %s275, [#allocation13], 128, 128, 8
        $region16: #{tpu_custom_call.1} parent=11 // pred_fallthru
          _
        // Predicated region
        $region17: #{tpu_custom_call.1} parent=11 // pred_check
          %p281 = pneg %p156
        $region18: #{tpu_custom_call.1} parent=11 // pred_check_branch
          %283 = sbr.rel (%p281) target = $region20
        $region19: #{tpu_custom_call.1} parent=11 // pred_region
          _
        $region20: #{tpu_custom_call.1} parent=11 // pred_fallthru
          _
        // Predicated region
        $region21: #{tpu_custom_call.1} parent=11 // pred_check
          %p284 = pneg %p177
        $region22: #{tpu_custom_call.1} parent=11 // pred_check_branch
          %286 = sbr.rel (%p284) target = $region24
        $region23: #{tpu_custom_call.1} parent=11 // pred_region
          %288 = vsyncadd [#allocation13], 0
          %s289 = sshll.u32 %s5, 4
          %s290 = int_to_ptr.hbm [resolvable:$true] %s289
          %s291 = sshll.u32 [#allocation14], 4
          %s292 = int_to_ptr.vmem [resolvable:$true] %s291
          %297 = dma.hbm_to_vmem [thread:$0]  %s290, 512, %s292, [#allocation13], 128, 128, 8
        $region24: #{tpu_custom_call.1} parent=11 // pred_fallthru
          _
        // Predicated region
        $region25: #{tpu_custom_call.1} parent=11 // pred_check
          %p298 = pneg %p198
        $region26: #{tpu_custom_call.1} parent=11 // pred_check_branch
          %300 = sbr.rel (%p298) target = $region28
        $region27: #{tpu_custom_call.1} parent=11 // pred_region
          _
        $region28: #{tpu_custom_call.1} parent=11 // pred_fallthru
          _
      $region12: #{tpu_custom_call.1} parent=5 // pred_fallthru
        _
      %p301 = scmp.lt.s32.totalorder %s24, 2
      // Predicated region
      $region29: #{tpu_custom_call.1} parent=5 // pred_check
        %p302 = pneg %p301
      $region30: #{tpu_custom_call.1} parent=5 // pred_check_branch
        %304 = sbr.rel (%p302) target = $region32
      $region31: #{tpu_custom_call.1} parent=5 // pred_region
        // Predicated region
        $region33: #{tpu_custom_call.1} parent=31 // pred_check
          %p305 = pneg %p56
        $region34: #{tpu_custom_call.1} parent=31 // pred_check_branch
          %307 = sbr.rel (%p305) target = $region36
        $region35: #{tpu_custom_call.1} parent=31 // pred_region
          %s308 = sand.u32 %s46, 1
          %s309 = scalar_lea.sflag [#allocation7], %s308
          %s310 = sand.u32 %s46, 1
          %s311 = smul.addr %s310, 16
          %s312 = scalar_lea.vmem [#allocation6], %s311
          %314 = vsyncadd %s309, 0
          %s315 = smul.addr %s31, 2
          %s316 = smul.addr %s315, 8
          %s317 = scalar_lea.hbm %s0, %s316
          %s318 = sshll.u32 %s317, 4
          %s319 = int_to_ptr.hbm [resolvable:$true] %s318
          %s320 = sshll.u32 %s312, 4
          %s321 = int_to_ptr.vmem [resolvable:$true] %s320
          %326 = dma.hbm_to_vmem [thread:$0]  %s319, 256, %s321, %s309, 128, 128, 8
        $region36: #{tpu_custom_call.1} parent=31 // pred_fallthru
          _
        // Predicated region
        $region37: #{tpu_custom_call.1} parent=31 // pred_check
          %p327 = pneg %p82
        $region38: #{tpu_custom_call.1} parent=31 // pred_check_branch
          %329 = sbr.rel (%p327) target = $region40
        $region39: #{tpu_custom_call.1} parent=31 // pred_region
          %s330 = sand.u32 %s24, 1
          %s331 = scalar_lea.sflag [#allocation10], %s330
          %s332 = sand.u32 %s72, 1
          %s333 = smul.addr %s332, 16
          %s334 = scalar_lea.vmem [#allocation9], %s333
          %336 = vsyncadd %s331, 0
          %s337 = smul.addr %s31, 2
          %s338 = smul.addr %s337, 8
          %s339 = scalar_lea.hbm %s1, %s338
          %s340 = sshll.u32 %s339, 4
          %s341 = int_to_ptr.hbm [resolvable:$true] %s340
          %s342 = sshll.u32 %s334, 4
          %s343 = int_to_ptr.vmem [resolvable:$true] %s342
          %348 = dma.hbm_to_vmem [thread:$0]  %s341, 256, %s343, %s331, 128, 128, 8
        $region40: #{tpu_custom_call.1} parent=31 // pred_fallthru
          _
        // Predicated region
        $region41: #{tpu_custom_call.1} parent=31 // pred_check
          %p349 = pneg %p108
        $region42: #{tpu_custom_call.1} parent=31 // pred_check_branch
          %351 = sbr.rel (%p349) target = $region44
        $region43: #{tpu_custom_call.1} parent=31 // pred_region
          %s352 = sand.u32 %s24, 1
          %s353 = scalar_lea.sflag [#allocation10], %s352
          %s354 = sand.u32 %s98, 1
          %s355 = smul.addr %s354, 16
          %s356 = scalar_lea.vmem [#allocation11], %s355
          %358 = vsyncadd %s353, 0
          %s359 = smul.addr %s31, 2
          %s360 = smul.addr %s359, 8
          %s361 = scalar_lea.hbm %s2, %s360
          %s362 = sshll.u32 %s361, 4
          %s363 = int_to_ptr.hbm [resolvable:$true] %s362
          %s364 = sshll.u32 %s356, 4
          %s365 = int_to_ptr.vmem [resolvable:$true] %s364
          %370 = dma.hbm_to_vmem [thread:$0]  %s363, 256, %s365, %s353, 128, 128, 8
        $region44: #{tpu_custom_call.1} parent=31 // pred_fallthru
          _
        // Predicated region
        $region45: #{tpu_custom_call.1} parent=31 // pred_check
          %p371 = pneg %p218
        $region46: #{tpu_custom_call.1} parent=31 // pred_check_branch
          %373 = sbr.rel (%p371) target = $region48
        $region47: #{tpu_custom_call.1} parent=31 // pred_region
          %p374 = scmp.lt.s32.totalorder %s31, 1
          %s375 = scalar_select %p374, %s31, 1
          %s376 = scalar_lea.vmem %s7, %s375
        $region48: #{tpu_custom_call.1} parent=31 // pred_fallthru
          _
      $region32: #{tpu_custom_call.1} parent=5 // pred_fallthru
        _
      %p377 = scmp.le.s32.totalorder 1, %s24
      %p378 = scmp.lt.s32.totalorder %s24, 3
      %p379 = pnand %p377, %p378
      %p380 = pneg %p379
      // Predicated region
      $region49: #{tpu_custom_call.1} parent=5 // pred_check
        _
      $region50: #{tpu_custom_call.1} parent=5 // pred_check_branch
        %382 = sbr.rel (%p379) target = $region52
      $region51: #{tpu_custom_call.1} parent=5 // pred_region
        %s383 = ssub.s32 %s24, 1
        %s384 = sand.u32 %s49, 1
        %s385 = scalar_lea.sflag [#allocation7], %s384
        %s386 = sand.u32 %s49, 1
        %s387 = smul.addr %s386, 16
        %s388 = scalar_lea.vmem [#allocation6], %s387
        // Predicated region
        $region53: #{tpu_custom_call.1} parent=51 // pred_check
          %p389 = pneg %p62
        $region54: #{tpu_custom_call.1} parent=51 // pred_check_branch
          %391 = sbr.rel (%p389) target = $region56
        $region55: #{tpu_custom_call.1} parent=51 // pred_region
          %393 = dma.done %s385, 256
        $region56: #{tpu_custom_call.1} parent=51 // pred_fallthru
          _
        %s394 = sand.u32 %s29, 1
        %s395 = scalar_lea.sflag [#allocation10], %s394
        %s396 = sand.u32 %s75, 1
        %s397 = smul.addr %s396, 16
        %s398 = scalar_lea.vmem [#allocation9], %s397
        // Predicated region
        $region57: #{tpu_custom_call.1} parent=51 // pred_check
          %p399 = pneg %p88
        $region58: #{tpu_custom_call.1} parent=51 // pred_check_branch
          %401 = sbr.rel (%p399) target = $region60
        $region59: #{tpu_custom_call.1} parent=51 // pred_region
          %403 = dma.done %s395, 256
        $region60: #{tpu_custom_call.1} parent=51 // pred_fallthru
          _
        %s404 = sand.u32 %s29, 1
        %s405 = scalar_lea.sflag [#allocation10], %s404
        %s406 = sand.u32 %s101, 1
        %s407 = smul.addr %s406, 16
        %s408 = scalar_lea.vmem [#allocation11], %s407
        // Predicated region
        $region61: #{tpu_custom_call.1} parent=51 // pred_check
          %p409 = pneg %p114
        $region62: #{tpu_custom_call.1} parent=51 // pred_check_branch
          %411 = sbr.rel (%p409) target = $region64
        $region63: #{tpu_custom_call.1} parent=51 // pred_region
          %413 = dma.done %s405, 256
        $region64: #{tpu_custom_call.1} parent=51 // pred_fallthru
          _
        // Predicated region
        $region65: #{tpu_custom_call.1} parent=51 // pred_check
          %p414 = pneg %p135
        $region66: #{tpu_custom_call.1} parent=51 // pred_check_branch
          %416 = sbr.rel (%p414) target = $region68
        $region67: #{tpu_custom_call.1} parent=51 // pred_region
          %418 = dma.done [#allocation13], 512
        $region68: #{tpu_custom_call.1} parent=51 // pred_fallthru
          _
        // Predicated region
        $region69: #{tpu_custom_call.1} parent=51 // pred_check
          %p419 = pneg %p177
        $region70: #{tpu_custom_call.1} parent=51 // pred_check_branch
          %421 = sbr.rel (%p419) target = $region72
        $region71: #{tpu_custom_call.1} parent=51 // pred_region
          %423 = dma.done [#allocation13], 512
        $region72: #{tpu_custom_call.1} parent=51 // pred_fallthru
          _
        %s424 = sand.u32 %s49, 1
        %s425 = scalar_lea.sflag [#allocation7], %s424
        %s426 = sand.u32 %s49, 1
        %s427 = smul.addr %s426, 16
        %s428 = scalar_lea.vmem [#allocation6], %s427
        %p429 = pneg %p62
        %p430 = pneg %p59
        %s431 = sand.u32 %s29, 1
        %s432 = scalar_lea.sflag [#allocation10], %s431
        %s433 = sand.u32 %s75, 1
        %s434 = smul.addr %s433, 16
        %s435 = scalar_lea.vmem [#allocation9], %s434
        %p436 = pneg %p88
        %p437 = pneg %p85
        %s438 = sand.u32 %s29, 1
        %s439 = scalar_lea.sflag [#allocation10], %s438
        %s440 = sand.u32 %s101, 1
        %s441 = smul.addr %s440, 16
        %s442 = scalar_lea.vmem [#allocation11], %s441
        %p443 = pneg %p114
        %p444 = pneg %p111
        %p445 = pneg %p135
        %p446 = pneg %p132
        %p447 = pneg %p156
        %p448 = pneg %p153
        %p449 = pneg %p177
        %p450 = pneg %p174
        %p451 = pneg %p198
        %p452 = pneg %p195
        %p453 = scmp.lt.s32.totalorder %s33, 1
        %s454 = scalar_select %p453, %s33, 1
        %s455 = scalar_lea.vmem %s7, %s454
        %p456 = pneg %p224
        %p457 = pneg %p221
        %p458 = pneg %p252
        %p459 = pneg %p249
        %s460 = sand.u32 %s239, 1
        %s461 = scalar_lea.sflag [#allocation8], %s460
        %s462 = sand.u32 %s239, 1
        %s463 = smul.addr %s462, 16
        %s464 = scalar_lea.vmem [#allocation15], %s463
        %p465 = scmp.lt.s32.totalorder %s33, 1
        %s466 = scalar_select %p465, %s33, 1
        %s467 = scalar_lea.vmem %s7, %s466
        %s468 = smul.u32 2, %s34
        %p469 = scmp.eq.s32.totalorder %s34, 0
        // Predicated region
        $region73: #{tpu_custom_call.1} parent=51 // pred_check
          %p470 = pneg %p469
        $region74: #{tpu_custom_call.1} parent=51 // pred_check_branch
          %472 = sbr.rel (%p470) target = $region76
        $region75: #{tpu_custom_call.1} parent=51 // pred_region
          %v473 = vld [vmem:[%s4] sm:$0x1]
          %v474 = vld [vmem:[%s388] sm:$0xff]
          %v475 = vld [vmem:[%s388 + $0x8] sm:$0xff]
          %v476 = vld [vmem:[#allocation12] sm:$0xff]
          %v477 = vld [vmem:[#allocation12 + $0x8] sm:$0xff]
          %v478 = vld [vmem:[#allocation12 + $0x10] sm:$0xff]
          %v479 = vld [vmem:[#allocation12 + $0x18] sm:$0xff]
          %v481 = vperm.slane %v473, 0
          %vm483 = vcmask 261120
          %v485 = vsel %vm483, %v474, 0
          %v488 = vsel %vm483, %v475, 0
          %490 = vmatpush.msra.mxu0 0.0
          %491 = vmatpush.msra.mxu0 0.0
          %492 = vmatpush.msra.mxu0 0.0
          %493 = vmatpush.msra.mxu0 0.0
          %494 = vmatpush.msra.mxu0 0.0
          %495 = vmatpush.msra.mxu0 0.0
          %496 = vmatpush.msra.mxu0 0.0
          %497 = vmatpush.msra.mxu0 0.0
          %498 = vmatpush.msra.mxu0 0.0
          %499 = vmatpush.msra.mxu0 0.0
          %500 = vmatpush.msra.mxu0 0.0
          %501 = vmatpush.msra.mxu0 0.0
          %502 = vmatpush.msra.mxu0 %v479
          %503 = vmatpush.msra.mxu0 %v478
          %504 = vmatpush.msra.mxu0 %v477
          %505 = vmatpush.msra.mxu0 %v476
          %506 = vmatmul.f32.gmra.mxu0 %v485
          %v507 = vpop.f32.mrf.mxu0
          %v508 = vadd.f32 %v481, %v507
          %509 = vmatmul.f32.gmra.mxu0 %v488
          %v510 = vpop.f32.mrf.mxu0
          %v511 = vadd.f32 %v481, %v510
          %512 = vdwg.mxu0
          %v513 = vld [vmem:[%s398] sm:$0xff]
          %v514 = vld [vmem:[%s398 + $0x8] sm:$0xff]
          %519 = vrot.lane.b32.xlu0 %v476, 96
          %v520 = vpop.permute.xlu0 %519
          %521 = vrot.lane.b32.xlu0 %v477, 96
          %v522 = vpop.permute.xlu0 %521
          %523 = vrot.lane.b32.xlu0 %v478, 96
          %v524 = vpop.permute.xlu0 %523
          %525 = vrot.lane.b32.xlu0 %v479, 96
          %v526 = vpop.permute.xlu0 %525
          %531 = vrot.lane.b32.xlu0 %v481, 96
          %v532 = vpop.permute.xlu0 %531
          %v535 = vsel %vm483, %v513, 0
          %v538 = vsel %vm483, %v514, 0
          %540 = vmatpush.msra.mxu0 0.0
          %541 = vmatpush.msra.mxu0 0.0
          %542 = vmatpush.msra.mxu0 0.0
          %543 = vmatpush.msra.mxu0 0.0
          %544 = vmatpush.msra.mxu0 0.0
          %545 = vmatpush.msra.mxu0 0.0
          %546 = vmatpush.msra.mxu0 0.0
          %547 = vmatpush.msra.mxu0 0.0
          %548 = vmatpush.msra.mxu0 0.0
          %549 = vmatpush.msra.mxu0 0.0
          %550 = vmatpush.msra.mxu0 0.0
          %551 = vmatpush.msra.mxu0 0.0
          %552 = vmatpush.msra.mxu0 %v526
          %553 = vmatpush.msra.mxu0 %v524
          %554 = vmatpush.msra.mxu0 %v522
          %555 = vmatpush.msra.mxu0 %v520
          %556 = vmatmul.f32.gmra.mxu0 %v535
          %v557 = vpop.f32.mrf.mxu0
          %v558 = vadd.f32 %v532, %v557
          %559 = vmatmul.f32.gmra.mxu0 %v538
          %v560 = vpop.f32.mrf.mxu0
          %v561 = vadd.f32 %v532, %v560
          %562 = vdwg.mxu0
          %v563 = vld [vmem:[%s408] sm:$0xff]
          %v564 = vld [vmem:[%s408 + $0x8] sm:$0xff]
          %565 = vrot.lane.b32.xlu0 %v476, 64
          %v566 = vpop.permute.xlu0 %565
          %567 = vrot.lane.b32.xlu0 %v477, 64
          %v568 = vpop.permute.xlu0 %567
          %569 = vrot.lane.b32.xlu0 %v478, 64
          %v570 = vpop.permute.xlu0 %569
          %571 = vrot.lane.b32.xlu0 %v479, 64
          %v572 = vpop.permute.xlu0 %571
          %577 = vrot.lane.b32.xlu0 %v481, 64
          %v578 = vpop.permute.xlu0 %577
          %v581 = vsel %vm483, %v563, 0
          %v584 = vsel %vm483, %v564, 0
          %586 = vmatpush.msra.mxu0 0.0
          %587 = vmatpush.msra.mxu0 0.0
          %588 = vmatpush.msra.mxu0 0.0
          %589 = vmatpush.msra.mxu0 0.0
          %590 = vmatpush.msra.mxu0 0.0
          %591 = vmatpush.msra.mxu0 0.0
          %592 = vmatpush.msra.mxu0 0.0
          %593 = vmatpush.msra.mxu0 0.0
          %594 = vmatpush.msra.mxu0 0.0
          %595 = vmatpush.msra.mxu0 0.0
          %596 = vmatpush.msra.mxu0 0.0
          %597 = vmatpush.msra.mxu0 0.0
          %598 = vmatpush.msra.mxu0 %v572
          %599 = vmatpush.msra.mxu0 %v570
          %600 = vmatpush.msra.mxu0 %v568
          %601 = vmatpush.msra.mxu0 %v566
          %602 = vmatmul.f32.gmra.mxu0 %v581
          %v603 = vpop.f32.mrf.mxu0
          %v604 = vadd.f32 %v578, %v603
          %605 = vmatmul.f32.gmra.mxu0 %v584
          %v606 = vpop.f32.mrf.mxu0
          %v607 = vadd.f32 %v578, %v606
          %608 = vdwg.mxu0
          %v609 = vmul.f32 %v508, 0.35355338
          %v610 = vmul.f32 %v511, 0.35355338
          %611 = vst.msk [vmem:[#allocation2] sm:$0xff] %vm483, %v609
          %612 = vst.msk [vmem:[#allocation2 + $0x8] sm:$0xff] %vm483, %v610
          %613 = vst.msk [vmem:[#allocation3] sm:$0xff] %vm483, %v558
          %614 = vst.msk [vmem:[#allocation3 + $0x8] sm:$0xff] %vm483, %v561
          %615 = vst.msk [vmem:[#allocation4] sm:$0xff] %vm483, %v604
          %616 = vst.msk [vmem:[#allocation4 + $0x8] sm:$0xff] %vm483, %v607
        $region76: #{tpu_custom_call.1} parent=51 // pred_fallthru
          _
        %s617 = smul.u32 %s34, 16
        %s618 = scalar_lea.vmem [#allocation2], %s617
        %v619 = vld [vmem:[%s618] sm:$0xff]
        %v620 = vld [vmem:[%s618 + $0x8] sm:$0xff]
        %v621 = vld [vmem:[#allocation3] sm:$0xff]
        %v622 = vld [vmem:[#allocation3 + $0x8] sm:$0xff]
        %v623 = vld [vmem:[#allocation4] sm:$0xff]
        %v624 = vld [vmem:[#allocation4 + $0x8] sm:$0xff]
        %v625 = vld [vmem:[%s467] sm:$0x1]
        %v627 = vperm.slane %v625, 0
        %vm629 = vcmp.eq.f32.partialorder %v627, 0.0
        %vm630 = vcmask 64512
        %v632 = vsel %vm630, %v619, 0
        %v635 = vsel %vm630, %v620, 0
        %v638 = vsel %vm630, %v621, 0
        %v641 = vsel %vm630, %v622, 0
        %643 = vmatpush.xpose.msra.mxu0 0.0
        %644 = vmatpush.xpose.msra.mxu0 0.0
        %645 = vmatpush.xpose.msra.mxu0 0.0
        %646 = vmatpush.xpose.msra.mxu0 0.0
        %647 = vmatpush.xpose.msra.mxu0 0.0
        %648 = vmatpush.xpose.msra.mxu0 0.0
        %649 = vmatpush.xpose.msra.mxu0 0.0
        %650 = vmatpush.xpose.msra.mxu0 0.0
        %651 = vmatpush.xpose.msra.mxu0 0.0
        %652 = vmatpush.xpose.msra.mxu0 0.0
        %653 = vmatpush.xpose.msra.mxu0 0.0
        %654 = vmatpush.xpose.msra.mxu0 0.0
        %655 = vmatpush.xpose.msra.mxu0 0.0
        %656 = vmatpush.xpose.msra.mxu0 0.0
        %657 = vmatpush.xpose.msra.mxu0 %v641
        %658 = vmatpush.xpose.msra.mxu0 %v638
        %659 = vmatmul.f32.gmra.mxu0 %v632
        %v660 = vpop.f32.mrf.mxu0
        %v661 = vadd.f32 0.0, %v660
        %662 = vmatmul.f32.gmra.mxu0 %v635
        %v663 = vpop.f32.mrf.mxu0
        %v664 = vadd.f32 0.0, %v663
        %665 = vdwg.mxu0
        %v666 = vsel %vm629, -1e+09, %v661
        %v667 = vsel %vm629, -1e+09, %v664
        %vm668 = vcmask 130048
        %v669 = vsel %vm668, %v666, -inf
        %670 = vmax.xlane.f32.xlu0 %v669
        %v671 = vpop.xlane.xlu0 %670
        %v672 = vsel %vm668, %v667, -inf
        %673 = vmax.xlane.f32.xlu0 %v672
        %v674 = vpop.xlane.xlu0 %673
        %v675 = vsub.f32 %v666, %v671
        %v676 = vsub.f32 %v667, %v674
        %v677 = vmul.f32 %v675, 1.442695
        %v678 = vpow.pop %v677
        %v679 = vmul.f32 %v676, 1.442695
        %v680 = vpow.pop %v679
        %v681 = vsel %vm668, %v678, 0.0
        %682 = vadd.xlane.f32.xlu0 %v681
        %v683 = vpop.xlane.xlu0 %682
        %v684 = vsel %vm668, %v680, 0.0
        %685 = vadd.xlane.f32.xlu0 %v684
        %v686 = vpop.xlane.xlu0 %685
        %v688 = vsel %vm668, %v678, 0
        %v691 = vsel %vm668, %v680, 0
        %693 = vmatpush.msra.mxu0 0.0
        %694 = vmatpush.msra.mxu0 0.0
        %695 = vmatpush.msra.mxu0 0.0
        %696 = vmatpush.msra.mxu0 0.0
        %697 = vmatpush.msra.mxu0 0.0
        %698 = vmatpush.msra.mxu0 0.0
        %699 = vmatpush.msra.mxu0 0.0
        %700 = vmatpush.msra.mxu0 0.0
        %701 = vmatpush.msra.mxu0 0.0
        %702 = vmatpush.msra.mxu0 0.0
        %703 = vmatpush.msra.mxu0 0.0
        %704 = vmatpush.msra.mxu0 0.0
        %705 = vmatpush.msra.mxu0 0.0
        %706 = vmatpush.msra.mxu0 0.0
        %707 = vmatpush.msra.mxu0 %v624
        %708 = vmatpush.msra.mxu0 %v623
        %709 = vmatmul.f32.gmra.mxu0 %v688
        %v710 = vpop.f32.mrf.mxu0
        %v711 = vadd.f32 0.0, %v710
        %712 = vmatmul.f32.gmra.mxu0 %v691
        %v713 = vpop.f32.mrf.mxu0
        %v714 = vadd.f32 0.0, %v713
        %715 = vdwg.mxu0
        %v716 = vrcp.pop %v683
        %v717 = vmul.f32 %v683, %v716
        %v718 = vsub.f32 1.0, %v717
        %v719 = vmul.f32 %v716, %v718
        %v720 = vadd.f32 %v716, %v719
        %vm721 = vweird.f32 %v683
        %vm722 = vweird.f32 %v716
        %vm723 = vmor %vm721, %vm722
        %v724 = vsel %vm723, %v716, %v720
        %v725 = vand.u32 2147483647, %v683
        %vm726 = vcmp.eq.f32.partialorder %v725, 8.507059e+37
        %v727 = vand.u32 %v683, 2147483648
        %v728 = vor.u32 1.1754944e-38, %v727
        %v729 = vsel %vm726, %v728, %v724
        %v730 = vrcp.pop %v686
        %v731 = vmul.f32 %v686, %v730
        %v732 = vsub.f32 1.0, %v731
        %v733 = vmul.f32 %v730, %v732
        %v734 = vadd.f32 %v730, %v733
        %vm735 = vweird.f32 %v686
        %vm736 = vweird.f32 %v730
        %vm737 = vmor %vm735, %vm736
        %v738 = vsel %vm737, %v730, %v734
        %v739 = vand.u32 2147483647, %v686
        %vm740 = vcmp.eq.f32.partialorder %v739, 8.507059e+37
        %v741 = vand.u32 %v686, 2147483648
        %v742 = vor.u32 1.1754944e-38, %v741
        %v743 = vsel %vm740, %v742, %v738
        %v744 = vmul.f32 %v711, %v729
        %v745 = vmul.f32 %v714, %v743
        %746 = vst.msk [vmem:[#allocation5] sm:$0xff] %vm630, %v744
        %747 = vst.msk [vmem:[#allocation5 + $0x8] sm:$0xff] %vm630, %v745
        %748 = vrot.lane.b32.xlu0 %v619, 120
        %v749 = vpop.permute.xlu0 %748
        %750 = vrot.lane.b32.xlu0 %v620, 120
        %v751 = vpop.permute.xlu0 %750
        %752 = vrot.lane.b32.xlu0 %v621, 120
        %v753 = vpop.permute.xlu0 %752
        %754 = vrot.lane.b32.xlu0 %v622, 120
        %v755 = vpop.permute.xlu0 %754
        %v756 = vsel %vm630, %v749, 0
        %v758 = vsel %vm630, %v751, 0
        %v760 = vsel %vm630, %v753, 0
        %v762 = vsel %vm630, %v755, 0
        %764 = vmatpush.xpose.msra.mxu0 0.0
        %765 = vmatpush.xpose.msra.mxu0 0.0
        %766 = vmatpush.xpose.msra.mxu0 0.0
        %767 = vmatpush.xpose.msra.mxu0 0.0
        %768 = vmatpush.xpose.msra.mxu0 0.0
        %769 = vmatpush.xpose.msra.mxu0 0.0
        %770 = vmatpush.xpose.msra.mxu0 0.0
        %771 = vmatpush.xpose.msra.mxu0 0.0
        %772 = vmatpush.xpose.msra.mxu0 0.0
        %773 = vmatpush.xpose.msra.mxu0 0.0
        %774 = vmatpush.xpose.msra.mxu0 0.0
        %775 = vmatpush.xpose.msra.mxu0 0.0
        %776 = vmatpush.xpose.msra.mxu0 0.0
        %777 = vmatpush.xpose.msra.mxu0 0.0
        %778 = vmatpush.xpose.msra.mxu0 %v762
        %779 = vmatpush.xpose.msra.mxu0 %v760
        %780 = vmatmul.f32.gmra.mxu0 %v756
        %v781 = vpop.f32.mrf.mxu0
        %v782 = vadd.f32 0.0, %v781
        %783 = vmatmul.f32.gmra.mxu0 %v758
        %v784 = vpop.f32.mrf.mxu0
        %v785 = vadd.f32 0.0, %v784
        %786 = vdwg.mxu0
        %v787 = vsel %vm629, -1e+09, %v782
        %v788 = vsel %vm629, -1e+09, %v785
        %v789 = vsel %vm668, %v787, -inf
        %790 = vmax.xlane.f32.xlu0 %v789
        %v791 = vpop.xlane.xlu0 %790
        %v792 = vsel %vm668, %v788, -inf
        %793 = vmax.xlane.f32.xlu0 %v792
        %v794 = vpop.xlane.xlu0 %793
        %v795 = vsub.f32 %v787, %v791
        %v796 = vsub.f32 %v788, %v794
        %v797 = vmul.f32 %v795, 1.442695
        %v798 = vpow.pop %v797
        %v799 = vmul.f32 %v796, 1.442695
        %v800 = vpow.pop %v799
        %v801 = vsel %vm668, %v798, 0.0
        %802 = vadd.xlane.f32.xlu0 %v801
        %v803 = vpop.xlane.xlu0 %802
        %v804 = vsel %vm668, %v800, 0.0
        %805 = vadd.xlane.f32.xlu0 %v804
        %v806 = vpop.xlane.xlu0 %805
        %809 = vrot.lane.b32.xlu0 %v623, 120
        %v810 = vpop.permute.xlu0 %809
        %811 = vrot.lane.b32.xlu0 %v624, 120
        %v812 = vpop.permute.xlu0 %811
        %v816 = vsel %vm668, %v798, 0
        %v819 = vsel %vm668, %v800, 0
        %821 = vmatpush.msra.mxu0 0.0
        %822 = vmatpush.msra.mxu0 0.0
        %823 = vmatpush.msra.mxu0 0.0
        %824 = vmatpush.msra.mxu0 0.0
        %825 = vmatpush.msra.mxu0 0.0
        %826 = vmatpush.msra.mxu0 0.0
        %827 = vmatpush.msra.mxu0 0.0
        %828 = vmatpush.msra.mxu0 0.0
        %829 = vmatpush.msra.mxu0 0.0
        %830 = vmatpush.msra.mxu0 0.0
        %831 = vmatpush.msra.mxu0 0.0
        %832 = vmatpush.msra.mxu0 0.0
        %833 = vmatpush.msra.mxu0 0.0
        %834 = vmatpush.msra.mxu0 0.0
        %835 = vmatpush.msra.mxu0 %v812
        %836 = vmatpush.msra.mxu0 %v810
        %837 = vmatmul.f32.gmra.mxu0 %v816
        %v838 = vpop.f32.mrf.mxu0
        %v839 = vadd.f32 0.0, %v838
        %840 = vmatmul.f32.gmra.mxu0 %v819
        %v841 = vpop.f32.mrf.mxu0
        %v842 = vadd.f32 0.0, %v841
        %843 = vdwg.mxu0
        %v844 = vrcp.pop %v803
        %v845 = vmul.f32 %v803, %v844
        %v846 = vsub.f32 1.0, %v845
        %v847 = vmul.f32 %v844, %v846
        %v848 = vadd.f32 %v844, %v847
        %vm849 = vweird.f32 %v803
        %vm850 = vweird.f32 %v844
        %vm851 = vmor %vm849, %vm850
        %v852 = vsel %vm851, %v844, %v848
        %v853 = vand.u32 2147483647, %v803
        %vm854 = vcmp.eq.f32.partialorder %v853, 8.507059e+37
        %v855 = vand.u32 %v803, 2147483648
        %v856 = vor.u32 1.1754944e-38, %v855
        %v857 = vsel %vm854, %v856, %v852
        %v858 = vrcp.pop %v806
        %v859 = vmul.f32 %v806, %v858
        %v860 = vsub.f32 1.0, %v859
        %v861 = vmul.f32 %v858, %v860
        %v862 = vadd.f32 %v858, %v861
        %vm863 = vweird.f32 %v806
        %vm864 = vweird.f32 %v858
        %vm865 = vmor %vm863, %vm864
        %v866 = vsel %vm865, %v858, %v862
        %v867 = vand.u32 2147483647, %v806
        %vm868 = vcmp.eq.f32.partialorder %v867, 8.507059e+37
        %v869 = vand.u32 %v806, 2147483648
        %v870 = vor.u32 1.1754944e-38, %v869
        %v871 = vsel %vm868, %v870, %v866
        %v872 = vmul.f32 %v839, %v857
        %v873 = vmul.f32 %v842, %v871
        %876 = vrot.lane.b32.xlu0 %v872, 8
        %v877 = vpop.permute.xlu0 %876
        %878 = vrot.lane.b32.xlu0 %v873, 8
        %v879 = vpop.permute.xlu0 %878
        %vm882 = vcmask 130112
        %883 = vst.msk [vmem:[#allocation5] sm:$0xff] %vm882, %v877
        %884 = vst.msk [vmem:[#allocation5 + $0x8] sm:$0xff] %vm882, %v879
        %885 = vrot.lane.b32.xlu0 %v619, 112
        %v886 = vpop.permute.xlu0 %885
        %887 = vrot.lane.b32.xlu0 %v620, 112
        %v888 = vpop.permute.xlu0 %887
        %889 = vrot.lane.b32.xlu0 %v621, 112
        %v890 = vpop.permute.xlu0 %889
        %891 = vrot.lane.b32.xlu0 %v622, 112
        %v892 = vpop.permute.xlu0 %891
        %v893 = vsel %vm630, %v886, 0
        %v895 = vsel %vm630, %v888, 0
        %v897 = vsel %vm630, %v890, 0
        %v899 = vsel %vm630, %v892, 0
        %901 = vmatpush.xpose.msra.mxu0 0.0
        %902 = vmatpush.xpose.msra.mxu0 0.0
        %903 = vmatpush.xpose.msra.mxu0 0.0
        %904 = vmatpush.xpose.msra.mxu0 0.0
        %905 = vmatpush.xpose.msra.mxu0 0.0
        %906 = vmatpush.xpose.msra.mxu0 0.0
        %907 = vmatpush.xpose.msra.mxu0 0.0
        %908 = vmatpush.xpose.msra.mxu0 0.0
        %909 = vmatpush.xpose.msra.mxu0 0.0
        %910 = vmatpush.xpose.msra.mxu0 0.0
        %911 = vmatpush.xpose.msra.mxu0 0.0
        %912 = vmatpush.xpose.msra.mxu0 0.0
        %913 = vmatpush.xpose.msra.mxu0 0.0
        %914 = vmatpush.xpose.msra.mxu0 0.0
        %915 = vmatpush.xpose.msra.mxu0 %v899
        %916 = vmatpush.xpose.msra.mxu0 %v897
        %917 = vmatmul.f32.gmra.mxu0 %v893
        %v918 = vpop.f32.mrf.mxu0
        %v919 = vadd.f32 0.0, %v918
        %920 = vmatmul.f32.gmra.mxu0 %v895
        %v921 = vpop.f32.mrf.mxu0
        %v922 = vadd.f32 0.0, %v921
        %923 = vdwg.mxu0
        %v924 = vsel %vm629, -1e+09, %v919
        %v925 = vsel %vm629, -1e+09, %v922
        %v926 = vsel %vm668, %v924, -inf
        %927 = vmax.xlane.f32.xlu0 %v926
        %v928 = vpop.xlane.xlu0 %927
        %v929 = vsel %vm668, %v925, -inf
        %930 = vmax.xlane.f32.xlu0 %v929
        %v931 = vpop.xlane.xlu0 %930
        %v932 = vsub.f32 %v924, %v928
        %v933 = vsub.f32 %v925, %v931
        %v934 = vmul.f32 %v932, 1.442695
        %v935 = vpow.pop %v934
        %v936 = vmul.f32 %v933, 1.442695
        %v937 = vpow.pop %v936
        %v938 = vsel %vm668, %v935, 0.0
        %939 = vadd.xlane.f32.xlu0 %v938
        %v940 = vpop.xlane.xlu0 %939
        %v941 = vsel %vm668, %v937, 0.0
        %942 = vadd.xlane.f32.xlu0 %v941
        %v943 = vpop.xlane.xlu0 %942
        %944 = vrot.lane.b32.xlu0 %v623, 112
        %v945 = vpop.permute.xlu0 %944
        %946 = vrot.lane.b32.xlu0 %v624, 112
        %v947 = vpop.permute.xlu0 %946
        %v951 = vsel %vm668, %v935, 0
        %v954 = vsel %vm668, %v937, 0
        %956 = vmatpush.msra.mxu0 0.0
        %957 = vmatpush.msra.mxu0 0.0
        %958 = vmatpush.msra.mxu0 0.0
        %959 = vmatpush.msra.mxu0 0.0
        %960 = vmatpush.msra.mxu0 0.0
        %961 = vmatpush.msra.mxu0 0.0
        %962 = vmatpush.msra.mxu0 0.0
        %963 = vmatpush.msra.mxu0 0.0
        %964 = vmatpush.msra.mxu0 0.0
        %965 = vmatpush.msra.mxu0 0.0
        %966 = vmatpush.msra.mxu0 0.0
        %967 = vmatpush.msra.mxu0 0.0
        %968 = vmatpush.msra.mxu0 0.0
        %969 = vmatpush.msra.mxu0 0.0
        %970 = vmatpush.msra.mxu0 %v947
        %971 = vmatpush.msra.mxu0 %v945
        %972 = vmatmul.f32.gmra.mxu0 %v951
        %v973 = vpop.f32.mrf.mxu0
        %v974 = vadd.f32 0.0, %v973
        %975 = vmatmul.f32.gmra.mxu0 %v954
        %v976 = vpop.f32.mrf.mxu0
        %v977 = vadd.f32 0.0, %v976
        %978 = vdwg.mxu0
        %v979 = vrcp.pop %v940
        %v980 = vmul.f32 %v940, %v979
        %v981 = vsub.f32 1.0, %v980
        %v982 = vmul.f32 %v979, %v981
        %v983 = vadd.f32 %v979, %v982
        %vm984 = vweird.f32 %v940
        %vm985 = vweird.f32 %v979
        %vm986 = vmor %vm984, %vm985
        %v987 = vsel %vm986, %v979, %v983
        %v988 = vand.u32 2147483647, %v940
        %vm989 = vcmp.eq.f32.partialorder %v988, 8.507059e+37
        %v990 = vand.u32 %v940, 2147483648
        %v991 = vor.u32 1.1754944e-38, %v990
        %v992 = vsel %vm989, %v991, %v987
        %v993 = vrcp.pop %v943
        %v994 = vmul.f32 %v943, %v993
        %v995 = vsub.f32 1.0, %v994
        %v996 = vmul.f32 %v993, %v995
        %v997 = vadd.f32 %v993, %v996
        %vm998 = vweird.f32 %v943
        %vm999 = vweird.f32 %v993
        %vm1000 = vmor %vm998, %vm999
        %v1001 = vsel %vm1000, %v993, %v997
        %v1002 = vand.u32 2147483647, %v943
        %vm1003 = vcmp.eq.f32.partialorder %v1002, 8.507059e+37
        %v1004 = vand.u32 %v943, 2147483648
        %v1005 = vor.u32 1.1754944e-38, %v1004
        %v1006 = vsel %vm1003, %v1005, %v1001
        %v1007 = vmul.f32 %v974, %v992
        %v1008 = vmul.f32 %v977, %v1006
        %1011 = vrot.lane.b32.xlu0 %v1007, 16
        %v1012 = vpop.permute.xlu0 %1011
        %1013 = vrot.lane.b32.xlu0 %v1008, 16
        %v1014 = vpop.permute.xlu0 %1013
        %vm1017 = vcmask 195712
        %1018 = vst.msk [vmem:[#allocation5] sm:$0xff] %vm1017, %v1012
        %1019 = vst.msk [vmem:[#allocation5 + $0x8] sm:$0xff] %vm1017, %v1014
        %1020 = vrot.lane.b32.xlu0 %v619, 104
        %v1021 = vpop.permute.xlu0 %1020
        %1022 = vrot.lane.b32.xlu0 %v620, 104
        %v1023 = vpop.permute.xlu0 %1022
        %1024 = vrot.lane.b32.xlu0 %v621, 104
        %v1025 = vpop.permute.xlu0 %1024
        %1026 = vrot.lane.b32.xlu0 %v622, 104
        %v1027 = vpop.permute.xlu0 %1026
        %v1028 = vsel %vm630, %v1021, 0
        %v1030 = vsel %vm630, %v1023, 0
        %v1032 = vsel %vm630, %v1025, 0
        %v1034 = vsel %vm630, %v1027, 0
        %1036 = vmatpush.xpose.msra.mxu0 0.0
        %1037 = vmatpush.xpose.msra.mxu0 0.0
        %1038 = vmatpush.xpose.msra.mxu0 0.0
        %1039 = vmatpush.xpose.msra.mxu0 0.0
        %1040 = vmatpush.xpose.msra.mxu0 0.0
        %1041 = vmatpush.xpose.msra.mxu0 0.0
        %1042 = vmatpush.xpose.msra.mxu0 0.0
        %1043 = vmatpush.xpose.msra.mxu0 0.0
        %1044 = vmatpush.xpose.msra.mxu0 0.0
        %1045 = vmatpush.xpose.msra.mxu0 0.0
        %1046 = vmatpush.xpose.msra.mxu0 0.0
        %1047 = vmatpush.xpose.msra.mxu0 0.0
        %1048 = vmatpush.xpose.msra.mxu0 0.0
        %1049 = vmatpush.xpose.msra.mxu0 0.0
        %1050 = vmatpush.xpose.msra.mxu0 %v1034
        %1051 = vmatpush.xpose.msra.mxu0 %v1032
        %1052 = vmatmul.f32.gmra.mxu0 %v1028
        %v1053 = vpop.f32.mrf.mxu0
        %v1054 = vadd.f32 0.0, %v1053
        %1055 = vmatmul.f32.gmra.mxu0 %v1030
        %v1056 = vpop.f32.mrf.mxu0
        %v1057 = vadd.f32 0.0, %v1056
        %1058 = vdwg.mxu0
        %v1059 = vsel %vm629, -1e+09, %v1054
        %v1060 = vsel %vm629, -1e+09, %v1057
        %v1061 = vsel %vm668, %v1059, -inf
        %1062 = vmax.xlane.f32.xlu0 %v1061
        %v1063 = vpop.xlane.xlu0 %1062
        %v1064 = vsel %vm668, %v1060, -inf
        %1065 = vmax.xlane.f32.xlu0 %v1064
        %v1066 = vpop.xlane.xlu0 %1065
        %v1067 = vsub.f32 %v1059, %v1063
        %v1068 = vsub.f32 %v1060, %v1066
        %v1069 = vmul.f32 %v1067, 1.442695
        %v1070 = vpow.pop %v1069
        %v1071 = vmul.f32 %v1068, 1.442695
        %v1072 = vpow.pop %v1071
        %v1073 = vsel %vm668, %v1070, 0.0
        %1074 = vadd.xlane.f32.xlu0 %v1073
        %v1075 = vpop.xlane.xlu0 %1074
        %v1076 = vsel %vm668, %v1072, 0.0
        %1077 = vadd.xlane.f32.xlu0 %v1076
        %v1078 = vpop.xlane.xlu0 %1077
        %1079 = vrot.lane.b32.xlu0 %v623, 104
        %v1080 = vpop.permute.xlu0 %1079
        %1081 = vrot.lane.b32.xlu0 %v624, 104
        %v1082 = vpop.permute.xlu0 %1081
        %v1086 = vsel %vm668, %v1070, 0
        %v1089 = vsel %vm668, %v1072, 0
        %1091 = vmatpush.msra.mxu0 0.0
        %1092 = vmatpush.msra.mxu0 0.0
        %1093 = vmatpush.msra.mxu0 0.0
        %1094 = vmatpush.msra.mxu0 0.0
        %1095 = vmatpush.msra.mxu0 0.0
        %1096 = vmatpush.msra.mxu0 0.0
        %1097 = vmatpush.msra.mxu0 0.0
        %1098 = vmatpush.msra.mxu0 0.0
        %1099 = vmatpush.msra.mxu0 0.0
        %1100 = vmatpush.msra.mxu0 0.0
        %1101 = vmatpush.msra.mxu0 0.0
        %1102 = vmatpush.msra.mxu0 0.0
        %1103 = vmatpush.msra.mxu0 0.0
        %1104 = vmatpush.msra.mxu0 0.0
        %1105 = vmatpush.msra.mxu0 %v1082
        %1106 = vmatpush.msra.mxu0 %v1080
        %1107 = vmatmul.f32.gmra.mxu0 %v1086
        %v1108 = vpop.f32.mrf.mxu0
        %v1109 = vadd.f32 0.0, %v1108
        %1110 = vmatmul.f32.gmra.mxu0 %v1089
        %v1111 = vpop.f32.mrf.mxu0
        %v1112 = vadd.f32 0.0, %v1111
        %1113 = vdwg.mxu0
        %v1114 = vrcp.pop %v1075
        %v1115 = vmul.f32 %v1075, %v1114
        %v1116 = vsub.f32 1.0, %v1115
        %v1117 = vmul.f32 %v1114, %v1116
        %v1118 = vadd.f32 %v1114, %v1117
        %vm1119 = vweird.f32 %v1075
        %vm1120 = vweird.f32 %v1114
        %vm1121 = vmor %vm1119, %vm1120
        %v1122 = vsel %vm1121, %v1114, %v1118
        %v1123 = vand.u32 2147483647, %v1075
        %vm1124 = vcmp.eq.f32.partialorder %v1123, 8.507059e+37
        %v1125 = vand.u32 %v1075, 2147483648
        %v1126 = vor.u32 1.1754944e-38, %v1125
        %v1127 = vsel %vm1124, %v1126, %v1122
        %v1128 = vrcp.pop %v1078
        %v1129 = vmul.f32 %v1078, %v1128
        %v1130 = vsub.f32 1.0, %v1129
        %v1131 = vmul.f32 %v1128, %v1130
        %v1132 = vadd.f32 %v1128, %v1131
        %vm1133 = vweird.f32 %v1078
        %vm1134 = vweird.f32 %v1128
        %vm1135 = vmor %vm1133, %vm1134
        %v1136 = vsel %vm1135, %v1128, %v1132
        %v1137 = vand.u32 2147483647, %v1078
        %vm1138 = vcmp.eq.f32.partialorder %v1137, 8.507059e+37
        %v1139 = vand.u32 %v1078, 2147483648
        %v1140 = vor.u32 1.1754944e-38, %v1139
        %v1141 = vsel %vm1138, %v1140, %v1136
        %v1142 = vmul.f32 %v1109, %v1127
        %v1143 = vmul.f32 %v1112, %v1141
        %1146 = vrot.lane.b32.xlu0 %v1142, 24
        %v1147 = vpop.permute.xlu0 %1146
        %1148 = vrot.lane.b32.xlu0 %v1143, 24
        %v1149 = vpop.permute.xlu0 %1148
        %vm1152 = vcmask 261312
        %1153 = vst.msk [vmem:[#allocation5] sm:$0xff] %vm1152, %v1147
        %1154 = vst.msk [vmem:[#allocation5 + $0x8] sm:$0xff] %vm1152, %v1149
        %v1155 = vld [vmem:[#allocation5] sm:$0xff]
        %v1156 = vld [vmem:[#allocation5 + $0x8] sm:$0xff]
        %v1157 = vld [vmem:[#allocation14] sm:$0xff]
        %v1158 = vld [vmem:[#allocation14 + $0x8] sm:$0xff]
        %v1159 = vld [vmem:[#allocation14 + $0x10] sm:$0xff]
        %v1160 = vld [vmem:[#allocation14 + $0x18] sm:$0xff]
        %v1161 = vld [vmem:[%s6] sm:$0x1]
        %v1163 = vperm.slane %v1161, 0
        %vm1165 = vcmask 261120
        %v1167 = vsel %vm1165, %v1155, 0
        %v1170 = vsel %vm1165, %v1156, 0
        %1172 = vmatpush.msra.mxu0 0.0
        %1173 = vmatpush.msra.mxu0 0.0
        %1174 = vmatpush.msra.mxu0 0.0
        %1175 = vmatpush.msra.mxu0 0.0
        %1176 = vmatpush.msra.mxu0 0.0
        %1177 = vmatpush.msra.mxu0 0.0
        %1178 = vmatpush.msra.mxu0 0.0
        %1179 = vmatpush.msra.mxu0 0.0
        %1180 = vmatpush.msra.mxu0 0.0
        %1181 = vmatpush.msra.mxu0 0.0
        %1182 = vmatpush.msra.mxu0 0.0
        %1183 = vmatpush.msra.mxu0 0.0
        %1184 = vmatpush.msra.mxu0 %v1160
        %1185 = vmatpush.msra.mxu0 %v1159
        %1186 = vmatpush.msra.mxu0 %v1158
        %1187 = vmatpush.msra.mxu0 %v1157
        %1188 = vmatmul.f32.gmra.mxu0 %v1167
        %v1189 = vpop.f32.mrf.mxu0
        %v1190 = vadd.f32 %v1163, %v1189
        %1191 = vmatmul.f32.gmra.mxu0 %v1170
        %v1192 = vpop.f32.mrf.mxu0
        %v1193 = vadd.f32 %v1163, %v1192
        %1194 = vdwg.mxu0
        %1195 = vst.msk [vmem:[%s464] sm:$0xff] %vm1165, %v1190
        %1196 = vst.msk [vmem:[%s464 + $0x8] sm:$0xff] %vm1165, %v1193
        %s1197 = sand.u32 %s239, 1
        %s1198 = scalar_lea.sflag [#allocation8], %s1197
        %s1199 = sand.u32 %s239, 1
        %s1200 = smul.addr %s1199, 16
        %s1201 = scalar_lea.vmem [#allocation15], %s1200
        // Predicated region
        $region77: #{tpu_custom_call.1} parent=51 // pred_check
          %p1202 = pneg %p249
        $region78: #{tpu_custom_call.1} parent=51 // pred_check_branch
          %1204 = sbr.rel (%p1202) target = $region80
        $region79: #{tpu_custom_call.1} parent=51 // pred_region
          %s1205 = smul.u32 2, %s34
          %1207 = vsyncadd %s1198, 0
          %s1208 = smul.addr %s33, 2
          %s1209 = sadd.s32 %s1205, %s1208
          %s1210 = smul.addr %s1209, 8
          %s1211 = scalar_lea.hbm %s8, %s1210
          %s1212 = sshll.u32 %s1201, 4
          %s1213 = int_to_ptr.vmem [resolvable:$true] %s1212
          %s1214 = sshll.u32 %s1211, 4
          %s1215 = int_to_ptr.hbm [resolvable:$true] %s1214
          %1220 = dma.vmem_to_hbm [thread:$0]  %s1213, 256, %s1215, %s1198, 128, 128, 8
        $region80: #{tpu_custom_call.1} parent=51 // pred_fallthru
          _
      $region52: #{tpu_custom_call.1} parent=5 // pred_fallthru
        _
      %p1221 = scmp.le.s32.totalorder 2, %s24
      // Predicated region
      $region81: #{tpu_custom_call.1} parent=5 // pred_check
        %p1222 = pneg %p1221
      $region82: #{tpu_custom_call.1} parent=5 // pred_check_branch
        %1224 = sbr.rel (%p1222) target = $region84
      $region83: #{tpu_custom_call.1} parent=5 // pred_region
        %s1225 = ssub.s32 %s24, 2
        // Predicated region
        $region85: #{tpu_custom_call.1} parent=83 // pred_check
          %p1226 = pneg %p255
        $region86: #{tpu_custom_call.1} parent=83 // pred_check_branch
          %1228 = sbr.rel (%p1226) target = $region88
        $region87: #{tpu_custom_call.1} parent=83 // pred_region
          %s1229 = sand.u32 %s240, 1
          %s1230 = scalar_lea.sflag [#allocation8], %s1229
          %s1231 = sand.u32 %s240, 1
          %s1232 = smul.addr %s1231, 16
          %s1233 = scalar_lea.vmem [#allocation15], %s1232
          %1235 = dma.done %s1230, 256
        $region88: #{tpu_custom_call.1} parent=83 // pred_fallthru
          _
      $region84: #{tpu_custom_call.1} parent=5 // pred_fallthru
        _
    $region6: #{tpu_custom_call.1} parent=1 // loop_footer
      %s28 = sadd.s32 1, %s24
    $region7: #{tpu_custom_call.1} parent=1 // loop_footer_branch
      %23 = sbr.rel target = $region3
    $region8: #{tpu_custom_call.1} parent=1 // loop_exit
      _
    %1236 = vsyncpa [#allocation7], 1
    %s1237 = scalar_lea.sflag [#allocation7], 1
    %1238 = vsyncpa %s1237, 1
    %1239 = vsyncpa [#allocation10], 1
    %s1240 = scalar_lea.sflag [#allocation10], 1
    %1241 = vsyncpa %s1240, 1
    %1242 = vsyncpa [#allocation13], 1
    %1243 = vsyncpa [#allocation8], 1
    %s1244 = scalar_lea.sflag [#allocation8], 1
    %1245 = vsyncpa %s1244, 1

</llo_original>
